<compile_context>
chip_gen: v6e
topology: v6e:2x2x1
jax: 0.10.0
libtpu: 0.0.40
codegen_flags: <defaults>
</compile_context>

<pallas_src>
import jax
import jax.numpy as jnp
from jax.experimental import pallas as pl
from jax.experimental.pallas import tpu as pltpu

LANE = 128
NODE_PAD = 16          # node-row padding: bf16 sublane tile
BAND = 16              # lane-band stride of the collapsed-K slab
DEG_LANE0 = 96         # first in-degree lane (one per relation)
ONES_LANE = 127        # constant-one lane (carries the self bias row)
SRC_ORDER = ("x", "c", "r")

DEFAULT_RELATIONS = ["x->x", "c->x", "r->x", "x<-x"]


def _round_up(n, m):
    return ((n + m - 1) // m) * m


def _pad2(a, rows, cols):
    return jnp.pad(a, ((0, rows - a.shape[0]), (0, cols - a.shape[1])))


def _rel_src_dst(name):
    if "->" in name:
        s, d = name.split("->")
    else:
        s, d = name.split("<-")
    return s, d


# ---------------------------------------------------------------------------
# Fused Pallas kernel: both CondGCN layers in one invocation.
# ---------------------------------------------------------------------------
def _make_fused_kernel(rel_src_idx, np_rows):
    n_rel = len(rel_src_idx)

    def _lane_shift(m, shift):
        # Place lanes [0, LANE-shift) of m at [shift, LANE); zero-fill below.  Exact because every
        # source slab has zeros above its real feature lanes (<= BAND), so bands never collide.
        if shift == 0:
            return m
        return jnp.concatenate(
            [jnp.zeros((m.shape[0], shift), m.dtype), m[:, : m.shape[1] - shift]], axis=1)

    def kernel(feats_ref, adj_ref, deg_ref, w_ref, b_ref, out_ref):
        f32, bf16 = jnp.float32, jnp.bfloat16

        x_bf, c_bf, r_bf = feats_ref[0], feats_ref[1], feats_ref[2]
        deg_lanes = deg_ref[...]                       # f32: per-relation in-degrees + ones lane

        w1cat, w1c, w1r, w1pool = w_ref[0], w_ref[1], w_ref[2], w_ref[3]
        w2cat, w2pool = w_ref[4], w_ref[5]
        b1pool, b2pool = b_ref[0:1, :], b_ref[1:2, :]
        b1c, b1r = b_ref[2:3, :], b_ref[3:4, :]

        def banded_messages(srcs_bf):
            # bf16 aggregation dots; each relation's message shifted into its disjoint lane band.
            acc = deg_lanes
            for k in range(n_rel):
                m = jnp.dot(adj_ref[k], srcs_bf[k], preferred_element_type=f32)
                acc = acc + _lane_shift(m, BAND * (k + 1))
            return acc

        # ---------------- layer 1: update x, c, r (stays in VMEM/vregs) ----------------
        srcs1 = (x_bf, c_bf, r_bf)
        lhs1 = (x_bf.astype(f32)
                + banded_messages([srcs1[i] for i in rel_src_idx])).astype(bf16)
        h_x = jnp.dot(lhs1, w1cat, preferred_element_type=f32)      # all x-path biases folded in
        h_c = jnp.dot(c_bf, w1c, preferred_element_type=f32) + b1c
        h_r = jnp.dot(r_bf, w1r, preferred_element_type=f32) + b1r
        a1 = jnp.maximum(jnp.concatenate([h_x, h_c, h_r], axis=0), 0.0).astype(bf16)
        y1 = jnp.dot(a1, w1pool, preferred_element_type=f32) + b1pool   # [3*NP,128] f32
        y1_bf = y1.astype(bf16)
        srcs2 = (y1_bf[0:np_rows],
                 y1_bf[np_rows:2 * np_rows],
                 y1_bf[2 * np_rows:3 * np_rows])

        # ---------------- layer 2: only the 'x' output is consumed ----------------
        lhs2 = (y1[0:np_rows]
                + banded_messages([srcs2[i] for i in rel_src_idx])).astype(bf16)
        h2 = jnp.dot(lhs2, w2cat, preferred_element_type=f32)
        a2 = jnp.maximum(h2, 0.0).astype(bf16)
        out_ref[...] = jnp.dot(a2, w2pool, preferred_element_type=f32) + b2pool

    return kernel


# ---------------------------------------------------------------------------
# Parameter init (reconstructed CondGCN, torch.nn.Linear default init scheme).
# ---------------------------------------------------------------------------
def _init_linear(key, fan_in, fan_out):
    k1, k2 = jax.random.split(key)
    bound = 1.0 / float(fan_in) ** 0.5
    w = jax.random.uniform(k1, (fan_in, fan_out), jnp.float32, -bound, bound)
    b = jax.random.uniform(k2, (fan_out,), jnp.float32, -bound, bound)
    return w, b


def init_cond_gcn(key, in_features, context_features, out_features,
                  hidden_features, root_features, relations):
    feats = {"x": in_features, "c": context_features, "r": root_features}
    names = ["x", "c", "r"] + list(relations)
    subkeys = jax.random.split(key, len(names) + 1)
    layers = {}
    for name, sk in zip(names, subkeys[:-1]):
        src = name if name in feats else _rel_src_dst(name)[0]
        layers[name] = _init_linear(sk, feats[src], hidden_features)
    pool = _init_linear(subkeys[-1], hidden_features, out_features)
    return {"layers": layers, "pool": pool}


def init_cond_gnn(key, in_features=3, context_features=2, out_features=3,
                  hidden_features=10, root_features=3, relations=None):
    relations = relations or DEFAULT_RELATIONS
    k1, k2 = jax.random.split(key)
    layer1 = init_cond_gcn(k1, in_features, context_features, hidden_features,
                           hidden_features, root_features, relations)
    layer2 = init_cond_gcn(k2, hidden_features, hidden_features, out_features,
                           hidden_features, hidden_features, relations)
    return [layer1, layer2]


# ---------------------------------------------------------------------------
# One-time (hoisted) preprocessing: pack parameters, build graph operands.
# ---------------------------------------------------------------------------
def pack_cond_gnn(raw_params, rels_into_x):
    """Pack all weights into one bf16 slab + one f32 bias slab (out of the forward hot path)."""
    n_rel = len(rels_into_x)
    assert BAND * (n_rel + 1) <= DEG_LANE0, "too many relations for the lane-band layout"
    assert DEG_LANE0 + n_rel <= ONES_LANE < LANE

    def build_cat(raw):
        # [128,128] block: self weight at rows [0,n_self), relation k at rows [16(k+1),...),
        # relation biases at the degree lanes, self bias at the ones lane.
        w_self, b_self = raw["layers"]["x"]
        hidden = w_self.shape[1]
        assert hidden <= LANE and w_self.shape[0] <= BAND
        wcat = jnp.zeros((LANE, LANE), jnp.float32)
        wcat = wcat.at[: w_self.shape[0], :hidden].set(w_self)
        wcat = wcat.at[ONES_LANE, :hidden].set(b_self)
        for k, name in enumerate(rels_into_x):
            w, b = raw["layers"][name]
            assert w.shape[0] <= BAND and w.shape[1] == hidden
            off = BAND * (k + 1)
            wcat = wcat.at[off:off + w.shape[0], :hidden].set(w)
            wcat = wcat.at[DEG_LANE0 + k, :hidden].set(b)
        return wcat

    def pad_w(w):
        return _pad2(w, LANE, LANE)

    l1, l2 = raw_params
    w_slab = jnp.stack([
        build_cat(l1), pad_w(l1["layers"]["c"][0]), pad_w(l1["layers"]["r"][0]),
        pad_w(l1["pool"][0]),
        build_cat(l2), pad_w(l2["pool"][0]),
    ]).astype(jnp.bfloat16)                                          # one bf16 weight DMA

    b_slab = jnp.zeros((8, LANE), jnp.float32)                       # one f32 bias DMA
    for row, b in enumerate([l1["pool"][1], l2["pool"][1],
                             l1["layers"]["c"][1], l1["layers"]["r"][1]]):
        b_slab = b_slab.at[row, : b.shape[0]].set(b)

    return {"w": w_slab, "b": b_slab}


def prepare_graph(data, relations):
    """Build (once per static graph) padded bf16 features, bf16 adjacencies and degree lanes."""
    x_dict = dict(data["x_dict"])
    edge_index_dict = data.get("edge_index_dict", {})
    for t in SRC_ORDER:
        assert x_dict.get(t) is not None, f"fused CondGNN kernel requires node type '{t}'"
        assert x_dict[t].shape[1] <= BAND, "feature width must fit a lane band"

    n = {t: x_dict[t].shape[0] for t in SRC_ORDER}
    np_rows = _round_up(max(n.values()), NODE_PAD)        # common node-row padding
    feats = jnp.stack([_pad2(x_dict[t], np_rows, LANE) for t in SRC_ORDER]).astype(jnp.bfloat16)

    rels_into_x = [nm for nm in relations if _rel_src_dst(nm)[1] == "x"]
    rel_src_idx, adjs = [], []
    deg_lanes = jnp.zeros((np_rows, LANE), jnp.float32).at[:, ONES_LANE].set(1.0)
    for k, name in enumerate(rels_into_x):
        s, _ = _rel_src_dst(name)
        ei = None
        for (es, er, ed), e in edge_index_dict.items():
            if f"{es}{er}{ed}" == name:
                ei = e
                break
        adj = jnp.zeros((n["x"], n[s]), jnp.float32)
        if ei is not None:
            adj = adj.at[ei[1], ei[0]].add(1.0)           # rows = dst, cols = src; multi-edges counted
        adj = _pad2(adj, np_rows, np_rows)
        deg_lanes = deg_lanes.at[:, DEG_LANE0 + k].set(jnp.sum(adj, axis=1))
        rel_src_idx.append(SRC_ORDER.index(s))
        adjs.append(adj)
    adj_slab = jnp.stack(adjs).astype(jnp.bfloat16)       # exact: small integer edge counts

    return {"feats": feats, "adj": adj_slab, "deg_lanes": deg_lanes,
            "rel_src_idx": tuple(rel_src_idx), "rels_into_x": rels_into_x,
            "n_x": n["x"], "np_rows": np_rows}


# ---------------------------------------------------------------------------
# Fused forward: one pallas_call for the entire CondGNN.
# ---------------------------------------------------------------------------
def cond_gnn_forward(packed, graph, out_features):
    np_rows = graph["np_rows"]
    rel_src_idx = graph["rel_src_idx"]
    n_rel = len(rel_src_idx)
    inputs = [graph["feats"], graph["adj"], graph["deg_lanes"], packed["w"], packed["b"]]

    def mm(m, k, n):
        return 2 * m * k * n

    flops = (2 * n_rel * mm(np_rows, np_rows, LANE)   # aggregation dots, both layers
             + 4 * mm(np_rows, LANE, LANE)            # wcat1, w1c, w1r, wcat2
             + mm(3 * np_rows, LANE, LANE)            # batched layer-1 pool
             + mm(np_rows, LANE, LANE))               # layer-2 pool
    bytes_accessed = sum(int(a.size) * a.dtype.itemsize for a in inputs) + np_rows * LANE * 4

    out = pl.pallas_call(
        _make_fused_kernel(rel_src_idx, np_rows),
        out_shape=jax.ShapeDtypeStruct((np_rows, LANE), jnp.float32),
        in_specs=[pl.BlockSpec(memory_space=pltpu.MemorySpace.VMEM)] * len(inputs),
        out_specs=pl.BlockSpec(memory_space=pltpu.MemorySpace.VMEM),
        cost_estimate=pl.CostEstimate(flops=flops, transcendentals=0,
                                      bytes_accessed=bytes_accessed),
    )(*inputs)
    return out[:graph["n_x"], :out_features]


# ---------------------------------------------------------------------------
# Pure-JAX f32 reference of the same (reconstructed) semantics, for a sanity check.
# ---------------------------------------------------------------------------
def cond_gnn_reference(raw_params, data, relations):
    x_dict = dict(data["x_dict"])
    edge_index_dict = data.get("edge_index_dict", {})
    rels_into_x = [nm for nm in relations if _rel_src_dst(nm)[1] == "x"]
    for layer in raw_params:
        w_x, b_x = layer["layers"]["x"]
        h = x_dict["x"] @ w_x + b_x
        for name in rels_into_x:
            s, _ = _rel_src_dst(name)
            w, b = layer["layers"][name]
            ei = None
            for (es, er, ed), e in edge_index_dict.items():
                if f"{es}{er}{ed}" == name:
                    ei = e
                    break
            if ei is None:
                continue
            msg = x_dict[s][ei[0]] @ w + b
            h = h + jnp.zeros_like(h).at[ei[1]].add(msg)
        w_p, b_p = layer["pool"]
        new = {"x": jnp.maximum(h, 0.0) @ w_p + b_p}
        for t in ("c", "r"):
            w, b = layer["layers"][t]
            new[t] = jnp.maximum(x_dict[t] @ w + b, 0.0) @ w_p + b_p
        x_dict = new
    return x_dict["x"]


if __name__ == "__main__":
    key = jax.random.PRNGKey(0)
    kp, kx, kc, kr = jax.random.split(key, 4)

    in_features, context_features, out_features = 3, 2, 3
    hidden_features, root_features = 10, 3
    relations = DEFAULT_RELATIONS
    raw_params = init_cond_gnn(kp, in_features, context_features, out_features,
                               hidden_features, root_features, relations)

    n_x, n_c, n_r = 8, 8, 1
    x = jax.random.normal(kx, (n_x, in_features), jnp.float32)        # pose nodes
    c = jax.random.normal(kc, (n_c, context_features), jnp.float32)   # 2D context
    r = jax.random.normal(kr, (n_r, root_features), jnp.float32)      # root node

    chain_src = jnp.arange(0, n_x - 1, dtype=jnp.int32)
    chain_dst = jnp.arange(1, n_x, dtype=jnp.int32)
    all_x = jnp.arange(n_x, dtype=jnp.int32)
    edge_index_dict = {
        ("x", "->", "x"): jnp.stack([chain_src, chain_dst]),
        ("x", "<-", "x"): jnp.stack([chain_dst, chain_src]),
        ("c", "->", "x"): jnp.stack([jnp.arange(n_c, dtype=jnp.int32), all_x]),
        ("r", "->", "x"): jnp.stack([jnp.zeros(n_x, jnp.int32), all_x]),
    }
    data = {"x_dict": {"x": x, "c": c, "r": r}, "edge_index_dict": edge_index_dict}

    # One-time (hoisted) preprocessing: packed params + static graph operands.
    rels_into_x = [nm for nm in relations if _rel_src_dst(nm)[1] == "x"]
    packed = pack_cond_gnn(raw_params, rels_into_x)
    graph = prepare_graph(data, relations)

    out = jax.block_until_ready(cond_gnn_forward(packed, graph, out_features))
    assert out.shape == (n_x, out_features), out.shape

    # Loose tolerance: kernel uses bf16 MXU operands with f32 accumulation vs the f32 reference.
    ref = cond_gnn_reference(raw_params, data, relations)
    assert jnp.allclose(out, ref, rtol=0.15, atol=0.15), float(jnp.max(jnp.abs(out - ref)))
    print("KERNEL_OK")
</pallas_src>

<mosaic_0001>
module attributes {stable_mosaic.version = 11 : i64} {
  func.func @kernel(%arg0: memref<3x16x128xbf16, #tpu.memory_space<vmem>>, %arg1: memref<4x16x16xbf16, #tpu.memory_space<vmem>>, %arg2: memref<16x128xf32, #tpu.memory_space<vmem>>, %arg3: memref<6x128x128xbf16, #tpu.memory_space<vmem>>, %arg4: memref<8x128xf32, #tpu.memory_space<vmem>>, %arg5: memref<16x128xf32, #tpu.memory_space<vmem>>) attributes {dimension_semantics = [], scalar_prefetch = 0 : i64, scratch_operands = 0 : i64, tpu.core_type = #tpu.core_type<tc>} {
    %c0 = arith.constant 0 : index
    %c0_0 = arith.constant 0 : index
    %c0_1 = arith.constant 0 : index
    %0 = vector.load %arg0[%c0, %c0_0, %c0_1] : memref<3x16x128xbf16, #tpu.memory_space<vmem>>, vector<1x16x128xbf16>
    %1 = vector.shape_cast %0 : vector<1x16x128xbf16> to vector<16x128xbf16>
    %c1 = arith.constant 1 : index
    %c0_2 = arith.constant 0 : index
    %c0_3 = arith.constant 0 : index
    %2 = vector.load %arg0[%c1, %c0_2, %c0_3] : memref<3x16x128xbf16, #tpu.memory_space<vmem>>, vector<1x16x128xbf16>
    %3 = vector.shape_cast %2 : vector<1x16x128xbf16> to vector<16x128xbf16>
    %c2 = arith.constant 2 : index
    %c0_4 = arith.constant 0 : index
    %c0_5 = arith.constant 0 : index
    %4 = vector.load %arg0[%c2, %c0_4, %c0_5] : memref<3x16x128xbf16, #tpu.memory_space<vmem>>, vector<1x16x128xbf16>
    %5 = vector.shape_cast %4 : vector<1x16x128xbf16> to vector<16x128xbf16>
    %c0_6 = arith.constant 0 : index
    %c0_7 = arith.constant 0 : index
    %6 = vector.load %arg2[%c0_6, %c0_7] : memref<16x128xf32, #tpu.memory_space<vmem>>, vector<16x128xf32>
    %c0_8 = arith.constant 0 : index
    %c0_9 = arith.constant 0 : index
    %c0_10 = arith.constant 0 : index
    %7 = vector.load %arg3[%c0_8, %c0_9, %c0_10] : memref<6x128x128xbf16, #tpu.memory_space<vmem>>, vector<1x128x128xbf16>
    %8 = vector.shape_cast %7 : vector<1x128x128xbf16> to vector<128x128xbf16>
    %c1_11 = arith.constant 1 : index
    %c0_12 = arith.constant 0 : index
    %c0_13 = arith.constant 0 : index
    %9 = vector.load %arg3[%c1_11, %c0_12, %c0_13] : memref<6x128x128xbf16, #tpu.memory_space<vmem>>, vector<1x128x128xbf16>
    %10 = vector.shape_cast %9 : vector<1x128x128xbf16> to vector<128x128xbf16>
    %c2_14 = arith.constant 2 : index
    %c0_15 = arith.constant 0 : index
    %c0_16 = arith.constant 0 : index
    %11 = vector.load %arg3[%c2_14, %c0_15, %c0_16] : memref<6x128x128xbf16, #tpu.memory_space<vmem>>, vector<1x128x128xbf16>
    %12 = vector.shape_cast %11 : vector<1x128x128xbf16> to vector<128x128xbf16>
    %c3 = arith.constant 3 : index
    %c0_17 = arith.constant 0 : index
    %c0_18 = arith.constant 0 : index
    %13 = vector.load %arg3[%c3, %c0_17, %c0_18] : memref<6x128x128xbf16, #tpu.memory_space<vmem>>, vector<1x128x128xbf16>
    %14 = vector.shape_cast %13 : vector<1x128x128xbf16> to vector<128x128xbf16>
    %c4 = arith.constant 4 : index
    %c0_19 = arith.constant 0 : index
    %c0_20 = arith.constant 0 : index
    %15 = vector.load %arg3[%c4, %c0_19, %c0_20] : memref<6x128x128xbf16, #tpu.memory_space<vmem>>, vector<1x128x128xbf16>
    %16 = vector.shape_cast %15 : vector<1x128x128xbf16> to vector<128x128xbf16>
    %c5 = arith.constant 5 : index
    %c0_21 = arith.constant 0 : index
    %c0_22 = arith.constant 0 : index
    %17 = vector.load %arg3[%c5, %c0_21, %c0_22] : memref<6x128x128xbf16, #tpu.memory_space<vmem>>, vector<1x128x128xbf16>
    %18 = vector.shape_cast %17 : vector<1x128x128xbf16> to vector<128x128xbf16>
    %c0_23 = arith.constant 0 : index
    %c0_24 = arith.constant 0 : index
    %19 = vector.load %arg4[%c0_23, %c0_24] : memref<8x128xf32, #tpu.memory_space<vmem>>, vector<1x128xf32>
    %c1_25 = arith.constant 1 : index
    %c0_26 = arith.constant 0 : index
    %20 = vector.load %arg4[%c1_25, %c0_26] : memref<8x128xf32, #tpu.memory_space<vmem>>, vector<1x128xf32>
    %c2_27 = arith.constant 2 : index
    %c0_28 = arith.constant 0 : index
    %21 = vector.load %arg4[%c2_27, %c0_28] : memref<8x128xf32, #tpu.memory_space<vmem>>, vector<1x128xf32>
    %c3_29 = arith.constant 3 : index
    %c0_30 = arith.constant 0 : index
    %22 = vector.load %arg4[%c3_29, %c0_30] : memref<8x128xf32, #tpu.memory_space<vmem>>, vector<1x128xf32>
    %23 = arith.extf %1 : vector<16x128xbf16> to vector<16x128xf32>
    %c0_31 = arith.constant 0 : index
    %c0_32 = arith.constant 0 : index
    %c0_33 = arith.constant 0 : index
    %24 = vector.load %arg1[%c0_31, %c0_32, %c0_33] : memref<4x16x16xbf16, #tpu.memory_space<vmem>>, vector<1x16x16xbf16>
    %25 = vector.shape_cast %24 : vector<1x16x16xbf16> to vector<16x16xbf16>
    %cst = arith.constant dense<0.000000e+00> : vector<16x128xf32>
    %26 = tpu.matmul %25, %1, %cst {dimension_numbers = #tpu.dot_dimension_numbers<[1], [0], [0], [1], [0, 0, 1, 1], [], []>} : vector<16x16xbf16>, vector<16x128xbf16>, vector<16x128xf32> -> vector<16x128xf32>
    %cst_34 = arith.constant 0.000000e+00 : f32
    %27 = vector.broadcast %cst_34 : f32 to vector<16x16xf32>
    %28 = vector.extract_strided_slice %26 {offsets = [0, 0], sizes = [16, 112], strides = [1, 1]} : vector<16x128xf32> to vector<16x112xf32>
    %29 = tpu.concatenate %27, %28 in 1 : vector<16x16xf32>, vector<16x112xf32> -> vector<16x128xf32>
    %30 = arith.addf %6, %29 : vector<16x128xf32>
    %c1_35 = arith.constant 1 : index
    %c0_36 = arith.constant 0 : index
    %c0_37 = arith.constant 0 : index
    %31 = vector.load %arg1[%c1_35, %c0_36, %c0_37] : memref<4x16x16xbf16, #tpu.memory_space<vmem>>, vector<1x16x16xbf16>
    %32 = vector.shape_cast %31 : vector<1x16x16xbf16> to vector<16x16xbf16>
    %cst_38 = arith.constant dense<0.000000e+00> : vector<16x128xf32>
    %33 = tpu.matmul %32, %3, %cst_38 {dimension_numbers = #tpu.dot_dimension_numbers<[1], [0], [0], [1], [0, 0, 1, 1], [], []>} : vector<16x16xbf16>, vector<16x128xbf16>, vector<16x128xf32> -> vector<16x128xf32>
    %cst_39 = arith.constant 0.000000e+00 : f32
    %34 = vector.broadcast %cst_39 : f32 to vector<16x32xf32>
    %35 = vector.extract_strided_slice %33 {offsets = [0, 0], sizes = [16, 96], strides = [1, 1]} : vector<16x128xf32> to vector<16x96xf32>
    %36 = tpu.concatenate %34, %35 in 1 : vector<16x32xf32>, vector<16x96xf32> -> vector<16x128xf32>
    %37 = arith.addf %30, %36 : vector<16x128xf32>
    %c2_40 = arith.constant 2 : index
    %c0_41 = arith.constant 0 : index
    %c0_42 = arith.constant 0 : index
    %38 = vector.load %arg1[%c2_40, %c0_41, %c0_42] : memref<4x16x16xbf16, #tpu.memory_space<vmem>>, vector<1x16x16xbf16>
    %39 = vector.shape_cast %38 : vector<1x16x16xbf16> to vector<16x16xbf16>
    %cst_43 = arith.constant dense<0.000000e+00> : vector<16x128xf32>
    %40 = tpu.matmul %39, %5, %cst_43 {dimension_numbers = #tpu.dot_dimension_numbers<[1], [0], [0], [1], [0, 0, 1, 1], [], []>} : vector<16x16xbf16>, vector<16x128xbf16>, vector<16x128xf32> -> vector<16x128xf32>
    %cst_44 = arith.constant 0.000000e+00 : f32
    %41 = vector.broadcast %cst_44 : f32 to vector<16x48xf32>
    %42 = vector.extract_strided_slice %40 {offsets = [0, 0], sizes = [16, 80], strides = [1, 1]} : vector<16x128xf32> to vector<16x80xf32>
    %43 = tpu.concatenate %41, %42 in 1 : vector<16x48xf32>, vector<16x80xf32> -> vector<16x128xf32>
    %44 = arith.addf %37, %43 : vector<16x128xf32>
    %c3_45 = arith.constant 3 : index
    %c0_46 = arith.constant 0 : index
    %c0_47 = arith.constant 0 : index
    %45 = vector.load %arg1[%c3_45, %c0_46, %c0_47] : memref<4x16x16xbf16, #tpu.memory_space<vmem>>, vector<1x16x16xbf16>
    %46 = vector.shape_cast %45 : vector<1x16x16xbf16> to vector<16x16xbf16>
    %cst_48 = arith.constant dense<0.000000e+00> : vector<16x128xf32>
    %47 = tpu.matmul %46, %1, %cst_48 {dimension_numbers = #tpu.dot_dimension_numbers<[1], [0], [0], [1], [0, 0, 1, 1], [], []>} : vector<16x16xbf16>, vector<16x128xbf16>, vector<16x128xf32> -> vector<16x128xf32>
    %cst_49 = arith.constant 0.000000e+00 : f32
    %48 = vector.broadcast %cst_49 : f32 to vector<16x64xf32>
    %49 = vector.extract_strided_slice %47 {offsets = [0, 0], sizes = [16, 64], strides = [1, 1]} : vector<16x128xf32> to vector<16x64xf32>
    %50 = tpu.concatenate %48, %49 in 1 : vector<16x64xf32>, vector<16x64xf32> -> vector<16x128xf32>
    %51 = arith.addf %44, %50 : vector<16x128xf32>
    %52 = arith.addf %23, %51 : vector<16x128xf32>
    %53 = arith.truncf %52 : vector<16x128xf32> to vector<16x128xbf16>
    %cst_50 = arith.constant dense<0.000000e+00> : vector<16x128xf32>
    %54 = tpu.matmul %53, %8, %cst_50 {dimension_numbers = #tpu.dot_dimension_numbers<[1], [0], [0], [1], [0, 0, 1, 1], [], []>} : vector<16x128xbf16>, vector<128x128xbf16>, vector<16x128xf32> -> vector<16x128xf32>
    %cst_51 = arith.constant dense<0.000000e+00> : vector<16x128xf32>
    %55 = tpu.matmul %3, %10, %cst_51 {dimension_numbers = #tpu.dot_dimension_numbers<[1], [0], [0], [1], [0, 0, 1, 1], [], []>} : vector<16x128xbf16>, vector<128x128xbf16>, vector<16x128xf32> -> vector<16x128xf32>
    %56 = vector.broadcast %21 : vector<1x128xf32> to vector<16x128xf32>
    %57 = arith.addf %55, %56 : vector<16x128xf32>
    %cst_52 = arith.constant dense<0.000000e+00> : vector<16x128xf32>
    %58 = tpu.matmul %5, %12, %cst_52 {dimension_numbers = #tpu.dot_dimension_numbers<[1], [0], [0], [1], [0, 0, 1, 1], [], []>} : vector<16x128xbf16>, vector<128x128xbf16>, vector<16x128xf32> -> vector<16x128xf32>
    %59 = vector.broadcast %22 : vector<1x128xf32> to vector<16x128xf32>
    %60 = arith.addf %58, %59 : vector<16x128xf32>
    %61 = tpu.concatenate %54, %57, %60 in 0 : vector<16x128xf32>, vector<16x128xf32>, vector<16x128xf32> -> vector<48x128xf32>
    %cst_53 = arith.constant 0.000000e+00 : f32
    %62 = vector.broadcast %cst_53 : f32 to vector<48x128xf32>
    %63 = arith.maximumf %61, %62 : vector<48x128xf32>
    %64 = arith.truncf %63 : vector<48x128xf32> to vector<48x128xbf16>
    %cst_54 = arith.constant dense<0.000000e+00> : vector<48x128xf32>
    %65 = tpu.matmul %64, %14, %cst_54 {dimension_numbers = #tpu.dot_dimension_numbers<[1], [0], [0], [1], [0, 0, 1, 1], [], []>} : vector<48x128xbf16>, vector<128x128xbf16>, vector<48x128xf32> -> vector<48x128xf32>
    %66 = vector.broadcast %19 : vector<1x128xf32> to vector<48x128xf32>
    %67 = arith.addf %65, %66 : vector<48x128xf32>
    %68 = arith.truncf %67 : vector<48x128xf32> to vector<48x128xbf16>
    %69 = vector.extract_strided_slice %68 {offsets = [0, 0], sizes = [16, 128], strides = [1, 1]} : vector<48x128xbf16> to vector<16x128xbf16>
    %70 = vector.extract_strided_slice %68 {offsets = [16, 0], sizes = [16, 128], strides = [1, 1]} : vector<48x128xbf16> to vector<16x128xbf16>
    %71 = vector.extract_strided_slice %68 {offsets = [32, 0], sizes = [16, 128], strides = [1, 1]} : vector<48x128xbf16> to vector<16x128xbf16>
    %72 = vector.extract_strided_slice %67 {offsets = [0, 0], sizes = [16, 128], strides = [1, 1]} : vector<48x128xf32> to vector<16x128xf32>
    %c0_55 = arith.constant 0 : index
    %c0_56 = arith.constant 0 : index
    %c0_57 = arith.constant 0 : index
    %73 = vector.load %arg1[%c0_55, %c0_56, %c0_57] : memref<4x16x16xbf16, #tpu.memory_space<vmem>>, vector<1x16x16xbf16>
    %74 = vector.shape_cast %73 : vector<1x16x16xbf16> to vector<16x16xbf16>
    %cst_58 = arith.constant dense<0.000000e+00> : vector<16x128xf32>
    %75 = tpu.matmul %74, %69, %cst_58 {dimension_numbers = #tpu.dot_dimension_numbers<[1], [0], [0], [1], [0, 0, 1, 1], [], []>} : vector<16x16xbf16>, vector<16x128xbf16>, vector<16x128xf32> -> vector<16x128xf32>
    %cst_59 = arith.constant 0.000000e+00 : f32
    %76 = vector.broadcast %cst_59 : f32 to vector<16x16xf32>
    %77 = vector.extract_strided_slice %75 {offsets = [0, 0], sizes = [16, 112], strides = [1, 1]} : vector<16x128xf32> to vector<16x112xf32>
    %78 = tpu.concatenate %76, %77 in 1 : vector<16x16xf32>, vector<16x112xf32> -> vector<16x128xf32>
    %79 = arith.addf %6, %78 : vector<16x128xf32>
    %c1_60 = arith.constant 1 : index
    %c0_61 = arith.constant 0 : index
    %c0_62 = arith.constant 0 : index
    %80 = vector.load %arg1[%c1_60, %c0_61, %c0_62] : memref<4x16x16xbf16, #tpu.memory_space<vmem>>, vector<1x16x16xbf16>
    %81 = vector.shape_cast %80 : vector<1x16x16xbf16> to vector<16x16xbf16>
    %cst_63 = arith.constant dense<0.000000e+00> : vector<16x128xf32>
    %82 = tpu.matmul %81, %70, %cst_63 {dimension_numbers = #tpu.dot_dimension_numbers<[1], [0], [0], [1], [0, 0, 1, 1], [], []>} : vector<16x16xbf16>, vector<16x128xbf16>, vector<16x128xf32> -> vector<16x128xf32>
    %cst_64 = arith.constant 0.000000e+00 : f32
    %83 = vector.broadcast %cst_64 : f32 to vector<16x32xf32>
    %84 = vector.extract_strided_slice %82 {offsets = [0, 0], sizes = [16, 96], strides = [1, 1]} : vector<16x128xf32> to vector<16x96xf32>
    %85 = tpu.concatenate %83, %84 in 1 : vector<16x32xf32>, vector<16x96xf32> -> vector<16x128xf32>
    %86 = arith.addf %79, %85 : vector<16x128xf32>
    %c2_65 = arith.constant 2 : index
    %c0_66 = arith.constant 0 : index
    %c0_67 = arith.constant 0 : index
    %87 = vector.load %arg1[%c2_65, %c0_66, %c0_67] : memref<4x16x16xbf16, #tpu.memory_space<vmem>>, vector<1x16x16xbf16>
    %88 = vector.shape_cast %87 : vector<1x16x16xbf16> to vector<16x16xbf16>
    %cst_68 = arith.constant dense<0.000000e+00> : vector<16x128xf32>
    %89 = tpu.matmul %88, %71, %cst_68 {dimension_numbers = #tpu.dot_dimension_numbers<[1], [0], [0], [1], [0, 0, 1, 1], [], []>} : vector<16x16xbf16>, vector<16x128xbf16>, vector<16x128xf32> -> vector<16x128xf32>
    %cst_69 = arith.constant 0.000000e+00 : f32
    %90 = vector.broadcast %cst_69 : f32 to vector<16x48xf32>
    %91 = vector.extract_strided_slice %89 {offsets = [0, 0], sizes = [16, 80], strides = [1, 1]} : vector<16x128xf32> to vector<16x80xf32>
    %92 = tpu.concatenate %90, %91 in 1 : vector<16x48xf32>, vector<16x80xf32> -> vector<16x128xf32>
    %93 = arith.addf %86, %92 : vector<16x128xf32>
    %c3_70 = arith.constant 3 : index
    %c0_71 = arith.constant 0 : index
    %c0_72 = arith.constant 0 : index
    %94 = vector.load %arg1[%c3_70, %c0_71, %c0_72] : memref<4x16x16xbf16, #tpu.memory_space<vmem>>, vector<1x16x16xbf16>
    %95 = vector.shape_cast %94 : vector<1x16x16xbf16> to vector<16x16xbf16>
    %cst_73 = arith.constant dense<0.000000e+00> : vector<16x128xf32>
    %96 = tpu.matmul %95, %69, %cst_73 {dimension_numbers = #tpu.dot_dimension_numbers<[1], [0], [0], [1], [0, 0, 1, 1], [], []>} : vector<16x16xbf16>, vector<16x128xbf16>, vector<16x128xf32> -> vector<16x128xf32>
    %cst_74 = arith.constant 0.000000e+00 : f32
    %97 = vector.broadcast %cst_74 : f32 to vector<16x64xf32>
    %98 = vector.extract_strided_slice %96 {offsets = [0, 0], sizes = [16, 64], strides = [1, 1]} : vector<16x128xf32> to vector<16x64xf32>
    %99 = tpu.concatenate %97, %98 in 1 : vector<16x64xf32>, vector<16x64xf32> -> vector<16x128xf32>
    %100 = arith.addf %93, %99 : vector<16x128xf32>
    %101 = arith.addf %72, %100 : vector<16x128xf32>
    %102 = arith.truncf %101 : vector<16x128xf32> to vector<16x128xbf16>
    %cst_75 = arith.constant dense<0.000000e+00> : vector<16x128xf32>
    %103 = tpu.matmul %102, %16, %cst_75 {dimension_numbers = #tpu.dot_dimension_numbers<[1], [0], [0], [1], [0, 0, 1, 1], [], []>} : vector<16x128xbf16>, vector<128x128xbf16>, vector<16x128xf32> -> vector<16x128xf32>
    %cst_76 = arith.constant 0.000000e+00 : f32
    %104 = vector.broadcast %cst_76 : f32 to vector<16x128xf32>
    %105 = arith.maximumf %103, %104 : vector<16x128xf32>
    %106 = arith.truncf %105 : vector<16x128xf32> to vector<16x128xbf16>
    %cst_77 = arith.constant dense<0.000000e+00> : vector<16x128xf32>
    %107 = tpu.matmul %106, %18, %cst_77 {dimension_numbers = #tpu.dot_dimension_numbers<[1], [0], [0], [1], [0, 0, 1, 1], [], []>} : vector<16x128xbf16>, vector<128x128xbf16>, vector<16x128xf32> -> vector<16x128xf32>
    %108 = vector.broadcast %20 : vector<1x128xf32> to vector<16x128xf32>
    %109 = arith.addf %107, %108 : vector<16x128xf32>
    %c0_78 = arith.constant 0 : index
    %c0_79 = arith.constant 0 : index
    %110 = vector.load %arg5[%c0_78, %c0_79] : memref<16x128xf32, #tpu.memory_space<vmem>>, vector<16x128xf32>
    tpu.vector_store %arg5[%c0_78, %c0_79], %109 {strides = array<i32>} : memref<16x128xf32, #tpu.memory_space<vmem>>, vector<16x128xf32>,
    return
  }
}

</mosaic_0001>

<llo_original>
// kernel: tpu_custom_call.1
$region0: #{tpu_custom_call.1}
  #allocation0 [shape = 'u32[]', space=smem, size = 0x4, offset = 0x4, fixed_abs, tag = 'smem constant byte address 0x4 - core index']
  #allocation1 [shape = 'u32[144,128]{1,0:T(1,128)}', space=vmem, size = 0x12000, scoped, tag = 'internal scratch']
  %s0 = inlined_call_operand.hbm [shape: bf16[3,16,128], index: 0, kind: input, shape index: {}]
  %s1 = inlined_call_operand.hbm [shape: bf16[4,16,16], index: 1, kind: input, shape index: {}]
  %s2 = inlined_call_operand.hbm [shape: f32[16,128], index: 2, kind: input, shape index: {}]
  %s3 = inlined_call_operand.hbm [shape: bf16[6,128,128], index: 3, kind: input, shape index: {}]
  %s4 = inlined_call_operand.hbm [shape: f32[8,128], index: 4, kind: input, shape index: {}]
  %s5 = inlined_call_operand.hbm [shape: f32[16,128], index: 5, kind: output, shape index: {}]
  %s6 = sld [smem:[#allocation0]]
  $region50: #{tpu_custom_call.1} parent=0
    _
  %s8 = ssub.s32 1, %s6
  %s9 = scalar_select 0, %s8, %s6
  $region1: #{tpu_custom_call.1} parent=0
    #allocation2 [shape = 'u8[12288]{0}', space=vmem, size = 0x3000, scoped, tag = 'input window, operand 0, single buffered']
    #allocation3 [shape = 's32[1]{0}', space=sflag, size = 0x4, scoped, tag = 'scoped memory for tpu_custom_call.1']
    #allocation4 [shape = 's32[1]{0}', space=sflag, size = 0x4, scoped, tag = 'scoped memory for tpu_custom_call.1']
    #allocation5 [shape = 'u8[16384]{0}', space=vmem, size = 0x4000, scoped, tag = 'input window, operand 1, single buffered']
    #allocation6 [shape = 's32[1]{0}', space=sflag, size = 0x4, scoped, tag = 'scoped memory for tpu_custom_call.1']
    #allocation7 [shape = 'u8[8192]{0}', space=vmem, size = 0x2000, scoped, tag = 'input window, operand 2, single buffered']
    #allocation8 [shape = 'u8[196608]{0}', space=vmem, size = 0x30000, scoped, tag = 'input window, operand 3, single buffered']
    #allocation9 [shape = 's32[1]{0}', space=sflag, size = 0x4, scoped, tag = 'scoped memory for tpu_custom_call.1']
    #allocation10 [shape = 'u8[4096]{0}', space=vmem, size = 0x1000, scoped, tag = 'input window, operand 4, single buffered']
    #allocation11 [shape = 'u8[8192]{0}', space=vmem, size = 0x2000, scoped, tag = 'output window, operand 0, single buffered']
    %10 = vsyncpa [#allocation3], 0
    %11 = vsyncpa [#allocation6], 0
    %12 = vsyncpa [#allocation9], 0
    %13 = vsyncpa [#allocation4], 0
    // Predicated region
    $region2: #{tpu_custom_call.1} parent=1 // pred_check
      _
    $region3: #{tpu_custom_call.1} parent=1 // pred_check_branch
      %15 = sbr.rel (0) target = $region5
    $region4: #{tpu_custom_call.1} parent=1 // pred_region
      %s17 = ssub.s32 384, 384
      %18 = vsyncadd [#allocation3], %s17
      %s19 = sshll.u32 [#allocation2], 4
      %s20 = int_to_ptr.vmem [resolvable:$true] %s19
      %25 = dma.hbm_to_vmem [thread:$0]  %s0, 384, %s20, [#allocation3], 64, 64, 4
    $region5: #{tpu_custom_call.1} parent=1 // pred_fallthru
      _
    // Predicated region
    $region6: #{tpu_custom_call.1} parent=1 // pred_check
      _
    $region7: #{tpu_custom_call.1} parent=1 // pred_check_branch
      %27 = sbr.rel (0) target = $region9
    $region8: #{tpu_custom_call.1} parent=1 // pred_region
      %s29 = ssub.s32 512, 512
      %30 = vsyncadd [#allocation6], %s29
      %s31 = sshll.u32 [#allocation5], 4
      %s32 = int_to_ptr.vmem [resolvable:$true] %s31
      %37 = dma.hbm_to_vmem [thread:$0]  %s1, 512, %s32, [#allocation6], 64, 64, 4
    $region9: #{tpu_custom_call.1} parent=1 // pred_fallthru
      _
    // Predicated region
    $region10: #{tpu_custom_call.1} parent=1 // pred_check
      _
    $region11: #{tpu_custom_call.1} parent=1 // pred_check_branch
      %39 = sbr.rel (0) target = $region13
    $region12: #{tpu_custom_call.1} parent=1 // pred_region
      %s41 = ssub.s32 256, 256
      %42 = vsyncadd [#allocation6], %s41
      %s43 = sshll.u32 [#allocation7], 4
      %s44 = int_to_ptr.vmem [resolvable:$true] %s43
      %49 = dma.hbm_to_vmem [thread:$0]  %s2, 256, %s44, [#allocation6], 128, 128, 8
    $region13: #{tpu_custom_call.1} parent=1 // pred_fallthru
      _
    // Predicated region
    $region14: #{tpu_custom_call.1} parent=1 // pred_check
      _
    $region15: #{tpu_custom_call.1} parent=1 // pred_check_branch
      %51 = sbr.rel (0) target = $region17
    $region16: #{tpu_custom_call.1} parent=1 // pred_region
      %s53 = ssub.s32 6144, 6144
      %54 = vsyncadd [#allocation9], %s53
      %s55 = sshll.u32 [#allocation8], 4
      %s56 = int_to_ptr.vmem [resolvable:$true] %s55
      %61 = dma.hbm_to_vmem [thread:$0]  %s3, 6144, %s56, [#allocation9], 64, 64, 4
    $region17: #{tpu_custom_call.1} parent=1 // pred_fallthru
      _
    // Predicated region
    $region18: #{tpu_custom_call.1} parent=1 // pred_check
      _
    $region19: #{tpu_custom_call.1} parent=1 // pred_check_branch
      %63 = sbr.rel (0) target = $region21
    $region20: #{tpu_custom_call.1} parent=1 // pred_region
      %s65 = ssub.s32 128, 128
      %66 = vsyncadd [#allocation9], %s65
      %s68 = sshll.u32 [#allocation10], 4
      %s69 = int_to_ptr.vmem [resolvable:$true] %s68
      %71 = dma.hbm_to_vmem [thread:$0]  %s4, 128, %s69, [#allocation9]
    $region21: #{tpu_custom_call.1} parent=1 // pred_fallthru
      _
    // Predicated region
    $region22: #{tpu_custom_call.1} parent=1 // pred_check
      _
    $region23: #{tpu_custom_call.1} parent=1 // pred_check_branch
      %73 = sbr.rel (0) target = $region25
    $region24: #{tpu_custom_call.1} parent=1 // pred_region
      %74 = dma.done [#allocation3], 384
    $region25: #{tpu_custom_call.1} parent=1 // pred_fallthru
      _
    // Predicated region
    $region26: #{tpu_custom_call.1} parent=1 // pred_check
      _
    $region27: #{tpu_custom_call.1} parent=1 // pred_check_branch
      %76 = sbr.rel (0) target = $region29
    $region28: #{tpu_custom_call.1} parent=1 // pred_region
      %77 = dma.done [#allocation6], 512
    $region29: #{tpu_custom_call.1} parent=1 // pred_fallthru
      _
    // Predicated region
    $region30: #{tpu_custom_call.1} parent=1 // pred_check
      _
    $region31: #{tpu_custom_call.1} parent=1 // pred_check_branch
      %79 = sbr.rel (0) target = $region33
    $region32: #{tpu_custom_call.1} parent=1 // pred_region
      %80 = dma.done [#allocation6], 256
    $region33: #{tpu_custom_call.1} parent=1 // pred_fallthru
      _
    // Predicated region
    $region34: #{tpu_custom_call.1} parent=1 // pred_check
      _
    $region35: #{tpu_custom_call.1} parent=1 // pred_check_branch
      %82 = sbr.rel (0) target = $region37
    $region36: #{tpu_custom_call.1} parent=1 // pred_region
      %83 = dma.done [#allocation9], 6144
    $region37: #{tpu_custom_call.1} parent=1 // pred_fallthru
      _
    // Predicated region
    $region38: #{tpu_custom_call.1} parent=1 // pred_check
      _
    $region39: #{tpu_custom_call.1} parent=1 // pred_check_branch
      %85 = sbr.rel (0) target = $region41
    $region40: #{tpu_custom_call.1} parent=1 // pred_region
      %86 = dma.done [#allocation9], 128
    $region41: #{tpu_custom_call.1} parent=1 // pred_fallthru
      _
    %v88 = vld [vmem:[#allocation2] sm:$0xf]
    %v89 = vld [vmem:[#allocation2 + $0x4] sm:$0xf]
    %s90 = scalar_lea.vmem [#allocation2], 8
    %v91 = vld [vmem:[%s90] sm:$0xf]
    %v92 = vld [vmem:[%s90 + $0x4] sm:$0xf]
    %s93 = scalar_lea.vmem [#allocation2], 16
    %v94 = vld [vmem:[%s93] sm:$0xf]
    %v95 = vld [vmem:[%s93 + $0x4] sm:$0xf]
    %v96 = vld [vmem:[#allocation7] sm:$0xff]
    %v97 = vld [vmem:[#allocation7 + $0x8] sm:$0xff]
    %v98 = vld [vmem:[#allocation8] sm:$0xf]
    %v99 = vld [vmem:[#allocation8 + $0x4] sm:$0xf]
    %v100 = vld [vmem:[#allocation8 + $0x8] sm:$0xf]
    %v101 = vld [vmem:[#allocation8 + $0xc] sm:$0xf]
    %v102 = vld [vmem:[#allocation8 + $0x10] sm:$0xf]
    %v103 = vld [vmem:[#allocation8 + $0x14] sm:$0xf]
    %v104 = vld [vmem:[#allocation8 + $0x18] sm:$0xf]
    %v105 = vld [vmem:[#allocation8 + $0x1c] sm:$0xf]
    %v106 = vld [vmem:[#allocation8 + $0x20] sm:$0xf]
    %v107 = vld [vmem:[#allocation8 + $0x24] sm:$0xf]
    %v108 = vld [vmem:[#allocation8 + $0x28] sm:$0xf]
    %v109 = vld [vmem:[#allocation8 + $0x2c] sm:$0xf]
    %v110 = vld [vmem:[#allocation8 + $0x30] sm:$0xf]
    %v111 = vld [vmem:[#allocation8 + $0x34] sm:$0xf]
    %v112 = vld [vmem:[#allocation8 + $0x38] sm:$0xf]
    %v113 = vld [vmem:[#allocation8 + $0x3c] sm:$0xf]
    %s114 = scalar_lea.vmem [#allocation8], 64
    %v115 = vld [vmem:[%s114] sm:$0xf]
    %v116 = vld [vmem:[%s114 + $0x4] sm:$0xf]
    %v117 = vld [vmem:[%s114 + $0x8] sm:$0xf]
    %v118 = vld [vmem:[%s114 + $0xc] sm:$0xf]
    %v119 = vld [vmem:[%s114 + $0x10] sm:$0xf]
    %v120 = vld [vmem:[%s114 + $0x14] sm:$0xf]
    %v121 = vld [vmem:[%s114 + $0x18] sm:$0xf]
    %v122 = vld [vmem:[%s114 + $0x1c] sm:$0xf]
    %v123 = vld [vmem:[%s114 + $0x20] sm:$0xf]
    %v124 = vld [vmem:[%s114 + $0x24] sm:$0xf]
    %v125 = vld [vmem:[%s114 + $0x28] sm:$0xf]
    %v126 = vld [vmem:[%s114 + $0x2c] sm:$0xf]
    %v127 = vld [vmem:[%s114 + $0x30] sm:$0xf]
    %v128 = vld [vmem:[%s114 + $0x34] sm:$0xf]
    %v129 = vld [vmem:[%s114 + $0x38] sm:$0xf]
    %v130 = vld [vmem:[%s114 + $0x3c] sm:$0xf]
    %s131 = scalar_lea.vmem [#allocation8], 128
    %v132 = vld [vmem:[%s131] sm:$0xf]
    %v133 = vld [vmem:[%s131 + $0x4] sm:$0xf]
    %v134 = vld [vmem:[%s131 + $0x8] sm:$0xf]
    %v135 = vld [vmem:[%s131 + $0xc] sm:$0xf]
    %v136 = vld [vmem:[%s131 + $0x10] sm:$0xf]
    %v137 = vld [vmem:[%s131 + $0x14] sm:$0xf]
    %v138 = vld [vmem:[%s131 + $0x18] sm:$0xf]
    %v139 = vld [vmem:[%s131 + $0x1c] sm:$0xf]
    %v140 = vld [vmem:[%s131 + $0x20] sm:$0xf]
    %v141 = vld [vmem:[%s131 + $0x24] sm:$0xf]
    %v142 = vld [vmem:[%s131 + $0x28] sm:$0xf]
    %v143 = vld [vmem:[%s131 + $0x2c] sm:$0xf]
    %v144 = vld [vmem:[%s131 + $0x30] sm:$0xf]
    %v145 = vld [vmem:[%s131 + $0x34] sm:$0xf]
    %v146 = vld [vmem:[%s131 + $0x38] sm:$0xf]
    %v147 = vld [vmem:[%s131 + $0x3c] sm:$0xf]
    %s148 = scalar_lea.vmem [#allocation8], 192
    %v149 = vld [vmem:[%s148] sm:$0xf]
    %v150 = vld [vmem:[%s148 + $0x4] sm:$0xf]
    %v151 = vld [vmem:[%s148 + $0x8] sm:$0xf]
    %v152 = vld [vmem:[%s148 + $0xc] sm:$0xf]
    %v153 = vld [vmem:[%s148 + $0x10] sm:$0xf]
    %v154 = vld [vmem:[%s148 + $0x14] sm:$0xf]
    %v155 = vld [vmem:[%s148 + $0x18] sm:$0xf]
    %v156 = vld [vmem:[%s148 + $0x1c] sm:$0xf]
    %v157 = vld [vmem:[%s148 + $0x20] sm:$0xf]
    %v158 = vld [vmem:[%s148 + $0x24] sm:$0xf]
    %v159 = vld [vmem:[%s148 + $0x28] sm:$0xf]
    %v160 = vld [vmem:[%s148 + $0x2c] sm:$0xf]
    %v161 = vld [vmem:[%s148 + $0x30] sm:$0xf]
    %v162 = vld [vmem:[%s148 + $0x34] sm:$0xf]
    %v163 = vld [vmem:[%s148 + $0x38] sm:$0xf]
    %v164 = vld [vmem:[%s148 + $0x3c] sm:$0xf]
    %s165 = scalar_lea.vmem [#allocation8], 256
    %v166 = vld [vmem:[%s165] sm:$0xf]
    %v167 = vld [vmem:[%s165 + $0x4] sm:$0xf]
    %v168 = vld [vmem:[%s165 + $0x8] sm:$0xf]
    %v169 = vld [vmem:[%s165 + $0xc] sm:$0xf]
    %v170 = vld [vmem:[%s165 + $0x10] sm:$0xf]
    %v171 = vld [vmem:[%s165 + $0x14] sm:$0xf]
    %v172 = vld [vmem:[%s165 + $0x18] sm:$0xf]
    %v173 = vld [vmem:[%s165 + $0x1c] sm:$0xf]
    %v174 = vld [vmem:[%s165 + $0x20] sm:$0xf]
    %v175 = vld [vmem:[%s165 + $0x24] sm:$0xf]
    %v176 = vld [vmem:[%s165 + $0x28] sm:$0xf]
    %v177 = vld [vmem:[%s165 + $0x2c] sm:$0xf]
    %v178 = vld [vmem:[%s165 + $0x30] sm:$0xf]
    %v179 = vld [vmem:[%s165 + $0x34] sm:$0xf]
    %v180 = vld [vmem:[%s165 + $0x38] sm:$0xf]
    %v181 = vld [vmem:[%s165 + $0x3c] sm:$0xf]
    %s182 = scalar_lea.vmem [#allocation8], 320
    %v183 = vld [vmem:[%s182] sm:$0xf]
    %v184 = vld [vmem:[%s182 + $0x4] sm:$0xf]
    %v185 = vld [vmem:[%s182 + $0x8] sm:$0xf]
    %v186 = vld [vmem:[%s182 + $0xc] sm:$0xf]
    %v187 = vld [vmem:[%s182 + $0x10] sm:$0xf]
    %v188 = vld [vmem:[%s182 + $0x14] sm:$0xf]
    %v189 = vld [vmem:[%s182 + $0x18] sm:$0xf]
    %v190 = vld [vmem:[%s182 + $0x1c] sm:$0xf]
    %v191 = vld [vmem:[%s182 + $0x20] sm:$0xf]
    %v192 = vld [vmem:[%s182 + $0x24] sm:$0xf]
    %v193 = vld [vmem:[%s182 + $0x28] sm:$0xf]
    %v194 = vld [vmem:[%s182 + $0x2c] sm:$0xf]
    %v195 = vld [vmem:[%s182 + $0x30] sm:$0xf]
    %v196 = vld [vmem:[%s182 + $0x34] sm:$0xf]
    %v197 = vld [vmem:[%s182 + $0x38] sm:$0xf]
    %v198 = vld [vmem:[%s182 + $0x3c] sm:$0xf]
    %v199 = vld [vmem:[#allocation10] sm:$0x1]
    %v200 = vld [vmem:[#allocation10 + $0x1] sm:$0x1]
    %v201 = vld [vmem:[#allocation10 + $0x2] sm:$0x1]
    %v202 = vld [vmem:[#allocation10 + $0x3] sm:$0x1]
    %v203 = vunpack.c.l.bf16 %v88
    %v204 = vunpack.c.l.bf16 %v89
    %v205 = vld [vmem:[#allocation5] sm:$0xf]
    %v206 = vld [vmem:[#allocation5 + $0x4] sm:$0xf]
    %v209 = vunpack.c.l.b16 %v205
    %v210 = vunpack.c.l.b16 %v206
    %v211 = vpack.c.b16 %v210, %v209
    %v214 = vunpack.c.l.b16 %v88
    %v215 = vunpack.c.l.b16 %v89
    %v216 = vpack.c.b16 %v215, %v214
    %vm218 = vcmask 130048
    %v220 = vsel %vm218, %v211, 0
    %222 = vmatprep.subr.bf16.mxu0 0
    %223 = vmatpush1.bf16.msra.mxu0 0
    %224 = vmatprep.subr.bf16.mxu0 0
    %225 = vmatpush1.bf16.msra.mxu0 0
    %226 = vmatprep.subr.bf16.mxu0 0
    %227 = vmatpush1.bf16.msra.mxu0 0
    %228 = vmatprep.subr.bf16.mxu0 0
    %229 = vmatpush1.bf16.msra.mxu0 0
    %230 = vmatprep.subr.bf16.mxu0 0
    %231 = vmatpush1.bf16.msra.mxu0 0
    %232 = vmatprep.subr.bf16.mxu0 0
    %233 = vmatpush1.bf16.msra.mxu0 0
    %234 = vmatprep.subr.bf16.mxu0 0
    %235 = vmatpush1.bf16.msra.mxu0 0
    %236 = vmatprep.subr.bf16.mxu0 0
    %237 = vmatpush1.bf16.msra.mxu0 %v216
    %238 = vmatprep.subr.bf16.mxu0 0
    %239 = vmatpush2.bf16.msra.mxu0 0
    %240 = vmatprep.subr.bf16.mxu0 0
    %241 = vmatpush2.bf16.msra.mxu0 0
    %242 = vmatprep.subr.bf16.mxu0 0
    %243 = vmatpush2.bf16.msra.mxu0 0
    %244 = vmatprep.subr.bf16.mxu0 0
    %245 = vmatpush2.bf16.msra.mxu0 0
    %246 = vmatprep.subr.bf16.mxu0 0
    %247 = vmatpush2.bf16.msra.mxu0 0
    %248 = vmatprep.subr.bf16.mxu0 0
    %249 = vmatpush2.bf16.msra.mxu0 0
    %250 = vmatprep.subr.bf16.mxu0 0
    %251 = vmatpush2.bf16.msra.mxu0 0
    %252 = vmatprep.subr.bf16.mxu0 0
    %253 = vmatpush2.bf16.msra.mxu0 0
    %254 = vmatprep.mubr.bf16.mxu0 0
    %255 = vmatmul.mubr.bf16.gmra.mxu0 %v220
    %v256 = vpop.f32.mrf.mxu0
    %v257 = vadd.f32 0.0, %v256
    %v258 = vpop.f32.mrf.mxu0
    %v259 = vpop.f32.mrf.mxu0
    %v260 = vadd.f32 0.0, %v259
    %v261 = vpop.f32.mrf.mxu0
    %262 = vdwg.mxu0
    %265 = vrot.lane.b32.xlu0 %v257, 16
    %v266 = vpop.permute.xlu0 %265
    %267 = vrot.lane.b32.xlu0 %v260, 16
    %v268 = vpop.permute.xlu0 %267
    %v271 = vsel %vm218, 0.0, %v266
    %v272 = vsel %vm218, 0.0, %v268
    %v273 = vadd.f32 %v96, %v271
    %v274 = vadd.f32 %v97, %v272
    %s275 = scalar_lea.vmem [#allocation5], 8
    %v276 = vld [vmem:[%s275] sm:$0xf]
    %v277 = vld [vmem:[%s275 + $0x4] sm:$0xf]
    %v280 = vunpack.c.l.b16 %v276
    %v281 = vunpack.c.l.b16 %v277
    %v282 = vpack.c.b16 %v281, %v280
    %v285 = vunpack.c.l.b16 %v91
    %v286 = vunpack.c.l.b16 %v92
    %v287 = vpack.c.b16 %v286, %v285
    %v290 = vsel %vm218, %v282, 0
    %292 = vmatprep.subr.bf16.mxu0 0
    %293 = vmatpush1.bf16.msra.mxu0 0
    %294 = vmatprep.subr.bf16.mxu0 0
    %295 = vmatpush1.bf16.msra.mxu0 0
    %296 = vmatprep.subr.bf16.mxu0 0
    %297 = vmatpush1.bf16.msra.mxu0 0
    %298 = vmatprep.subr.bf16.mxu0 0
    %299 = vmatpush1.bf16.msra.mxu0 0
    %300 = vmatprep.subr.bf16.mxu0 0
    %301 = vmatpush1.bf16.msra.mxu0 0
    %302 = vmatprep.subr.bf16.mxu0 0
    %303 = vmatpush1.bf16.msra.mxu0 0
    %304 = vmatprep.subr.bf16.mxu0 0
    %305 = vmatpush1.bf16.msra.mxu0 0
    %306 = vmatprep.subr.bf16.mxu0 0
    %307 = vmatpush1.bf16.msra.mxu0 %v287
    %308 = vmatprep.subr.bf16.mxu0 0
    %309 = vmatpush2.bf16.msra.mxu0 0
    %310 = vmatprep.subr.bf16.mxu0 0
    %311 = vmatpush2.bf16.msra.mxu0 0
    %312 = vmatprep.subr.bf16.mxu0 0
    %313 = vmatpush2.bf16.msra.mxu0 0
    %314 = vmatprep.subr.bf16.mxu0 0
    %315 = vmatpush2.bf16.msra.mxu0 0
    %316 = vmatprep.subr.bf16.mxu0 0
    %317 = vmatpush2.bf16.msra.mxu0 0
    %318 = vmatprep.subr.bf16.mxu0 0
    %319 = vmatpush2.bf16.msra.mxu0 0
    %320 = vmatprep.subr.bf16.mxu0 0
    %321 = vmatpush2.bf16.msra.mxu0 0
    %322 = vmatprep.subr.bf16.mxu0 0
    %323 = vmatpush2.bf16.msra.mxu0 0
    %324 = vmatprep.mubr.bf16.mxu0 0
    %325 = vmatmul.mubr.bf16.gmra.mxu0 %v290
    %v326 = vpop.f32.mrf.mxu0
    %v327 = vadd.f32 0.0, %v326
    %v328 = vpop.f32.mrf.mxu0
    %v329 = vpop.f32.mrf.mxu0
    %v330 = vadd.f32 0.0, %v329
    %v331 = vpop.f32.mrf.mxu0
    %332 = vdwg.mxu0
    %335 = vrot.lane.b32.xlu0 %v327, 32
    %v336 = vpop.permute.xlu0 %335
    %337 = vrot.lane.b32.xlu0 %v330, 32
    %v338 = vpop.permute.xlu0 %337
    %vm341 = vcmask 261120
    %v342 = vsel %vm341, 0.0, %v336
    %v343 = vsel %vm341, 0.0, %v338
    %v344 = vadd.f32 %v273, %v342
    %v345 = vadd.f32 %v274, %v343
    %s346 = scalar_lea.vmem [#allocation5], 16
    %v347 = vld [vmem:[%s346] sm:$0xf]
    %v348 = vld [vmem:[%s346 + $0x4] sm:$0xf]
    %v351 = vunpack.c.l.b16 %v347
    %v352 = vunpack.c.l.b16 %v348
    %v353 = vpack.c.b16 %v352, %v351
    %v356 = vunpack.c.l.b16 %v94
    %v357 = vunpack.c.l.b16 %v95
    %v358 = vpack.c.b16 %v357, %v356
    %v361 = vsel %vm218, %v353, 0
    %363 = vmatprep.subr.bf16.mxu0 0
    %364 = vmatpush1.bf16.msra.mxu0 0
    %365 = vmatprep.subr.bf16.mxu0 0
    %366 = vmatpush1.bf16.msra.mxu0 0
    %367 = vmatprep.subr.bf16.mxu0 0
    %368 = vmatpush1.bf16.msra.mxu0 0
    %369 = vmatprep.subr.bf16.mxu0 0
    %370 = vmatpush1.bf16.msra.mxu0 0
    %371 = vmatprep.subr.bf16.mxu0 0
    %372 = vmatpush1.bf16.msra.mxu0 0
    %373 = vmatprep.subr.bf16.mxu0 0
    %374 = vmatpush1.bf16.msra.mxu0 0
    %375 = vmatprep.subr.bf16.mxu0 0
    %376 = vmatpush1.bf16.msra.mxu0 0
    %377 = vmatprep.subr.bf16.mxu0 0
    %378 = vmatpush1.bf16.msra.mxu0 %v358
    %379 = vmatprep.subr.bf16.mxu0 0
    %380 = vmatpush2.bf16.msra.mxu0 0
    %381 = vmatprep.subr.bf16.mxu0 0
    %382 = vmatpush2.bf16.msra.mxu0 0
    %383 = vmatprep.subr.bf16.mxu0 0
    %384 = vmatpush2.bf16.msra.mxu0 0
    %385 = vmatprep.subr.bf16.mxu0 0
    %386 = vmatpush2.bf16.msra.mxu0 0
    %387 = vmatprep.subr.bf16.mxu0 0
    %388 = vmatpush2.bf16.msra.mxu0 0
    %389 = vmatprep.subr.bf16.mxu0 0
    %390 = vmatpush2.bf16.msra.mxu0 0
    %391 = vmatprep.subr.bf16.mxu0 0
    %392 = vmatpush2.bf16.msra.mxu0 0
    %393 = vmatprep.subr.bf16.mxu0 0
    %394 = vmatpush2.bf16.msra.mxu0 0
    %395 = vmatprep.mubr.bf16.mxu0 0
    %396 = vmatmul.mubr.bf16.gmra.mxu0 %v361
    %v397 = vpop.f32.mrf.mxu0
    %v398 = vadd.f32 0.0, %v397
    %v399 = vpop.f32.mrf.mxu0
    %v400 = vpop.f32.mrf.mxu0
    %v401 = vadd.f32 0.0, %v400
    %v402 = vpop.f32.mrf.mxu0
    %403 = vdwg.mxu0
    %406 = vrot.lane.b32.xlu0 %v398, 48
    %v407 = vpop.permute.xlu0 %406
    %408 = vrot.lane.b32.xlu0 %v401, 48
    %v409 = vpop.permute.xlu0 %408
    %vm412 = vcmask 392192
    %v413 = vsel %vm412, 0.0, %v407
    %v414 = vsel %vm412, 0.0, %v409
    %v415 = vadd.f32 %v344, %v413
    %v416 = vadd.f32 %v345, %v414
    %s417 = scalar_lea.vmem [#allocation5], 24
    %v418 = vld [vmem:[%s417] sm:$0xf]
    %v419 = vld [vmem:[%s417 + $0x4] sm:$0xf]
    %v422 = vunpack.c.l.b16 %v418
    %v423 = vunpack.c.l.b16 %v419
    %v424 = vpack.c.b16 %v423, %v422
    %v426 = vsel %vm218, %v424, 0
    %428 = vmatprep.subr.bf16.mxu0 0
    %429 = vmatpush1.bf16.msra.mxu0 0
    %430 = vmatprep.subr.bf16.mxu0 0
    %431 = vmatpush1.bf16.msra.mxu0 0
    %432 = vmatprep.subr.bf16.mxu0 0
    %433 = vmatpush1.bf16.msra.mxu0 0
    %434 = vmatprep.subr.bf16.mxu0 0
    %435 = vmatpush1.bf16.msra.mxu0 0
    %436 = vmatprep.subr.bf16.mxu0 0
    %437 = vmatpush1.bf16.msra.mxu0 0
    %438 = vmatprep.subr.bf16.mxu0 0
    %439 = vmatpush1.bf16.msra.mxu0 0
    %440 = vmatprep.subr.bf16.mxu0 0
    %441 = vmatpush1.bf16.msra.mxu0 0
    %442 = vmatprep.subr.bf16.mxu0 0
    %443 = vmatpush1.bf16.msra.mxu0 %v216
    %444 = vmatprep.subr.bf16.mxu0 0
    %445 = vmatpush2.bf16.msra.mxu0 0
    %446 = vmatprep.subr.bf16.mxu0 0
    %447 = vmatpush2.bf16.msra.mxu0 0
    %448 = vmatprep.subr.bf16.mxu0 0
    %449 = vmatpush2.bf16.msra.mxu0 0
    %450 = vmatprep.subr.bf16.mxu0 0
    %451 = vmatpush2.bf16.msra.mxu0 0
    %452 = vmatprep.subr.bf16.mxu0 0
    %453 = vmatpush2.bf16.msra.mxu0 0
    %454 = vmatprep.subr.bf16.mxu0 0
    %455 = vmatpush2.bf16.msra.mxu0 0
    %456 = vmatprep.subr.bf16.mxu0 0
    %457 = vmatpush2.bf16.msra.mxu0 0
    %458 = vmatprep.subr.bf16.mxu0 0
    %459 = vmatpush2.bf16.msra.mxu0 0
    %460 = vmatprep.mubr.bf16.mxu0 0
    %461 = vmatmul.mubr.bf16.gmra.mxu0 %v426
    %v462 = vpop.f32.mrf.mxu0
    %v463 = vadd.f32 0.0, %v462
    %v464 = vpop.f32.mrf.mxu0
    %v465 = vpop.f32.mrf.mxu0
    %v466 = vadd.f32 0.0, %v465
    %v467 = vpop.f32.mrf.mxu0
    %468 = vdwg.mxu0
    %471 = vrot.lane.b32.xlu0 %v463, 64
    %v472 = vpop.permute.xlu0 %471
    %473 = vrot.lane.b32.xlu0 %v466, 64
    %v474 = vpop.permute.xlu0 %473
    %vm477 = vcmask 523264
    %v478 = vsel %vm477, 0.0, %v472
    %v479 = vsel %vm477, 0.0, %v474
    %v480 = vadd.f32 %v415, %v478
    %v481 = vadd.f32 %v416, %v479
    %v482 = vadd.f32 %v203, %v480
    %v483 = vadd.f32 %v204, %v481
    %v484 = vpack.c.bf16 %v483, %v482
    %v501 = vunpack.c.l.b16 %v98
    %v502 = vunpack.c.l.b16 %v99
    %v503 = vunpack.c.l.b16 %v100
    %v504 = vunpack.c.l.b16 %v101
    %v505 = vunpack.c.l.b16 %v102
    %v506 = vunpack.c.l.b16 %v103
    %v507 = vunpack.c.l.b16 %v104
    %v508 = vunpack.c.l.b16 %v105
    %v509 = vunpack.c.l.b16 %v106
    %v510 = vunpack.c.l.b16 %v107
    %v511 = vunpack.c.l.b16 %v108
    %v512 = vunpack.c.l.b16 %v109
    %v513 = vunpack.c.l.b16 %v110
    %v514 = vunpack.c.l.b16 %v111
    %v515 = vunpack.c.l.b16 %v112
    %v516 = vunpack.c.l.b16 %v113
    %v517 = vpack.c.b16 %v502, %v501
    %v518 = vpack.c.b16 %v504, %v503
    %v519 = vpack.c.b16 %v506, %v505
    %v520 = vpack.c.b16 %v508, %v507
    %v521 = vpack.c.b16 %v510, %v509
    %v522 = vpack.c.b16 %v512, %v511
    %v523 = vpack.c.b16 %v514, %v513
    %v524 = vpack.c.b16 %v516, %v515
    %533 = vmatprep.subr.bf16.mxu0 0
    %534 = vmatpush1.bf16.msra.mxu0 %v524
    %535 = vmatprep.subr.bf16.mxu0 0
    %536 = vmatpush1.bf16.msra.mxu0 %v523
    %537 = vmatprep.subr.bf16.mxu0 0
    %538 = vmatpush1.bf16.msra.mxu0 %v522
    %539 = vmatprep.subr.bf16.mxu0 0
    %540 = vmatpush1.bf16.msra.mxu0 %v521
    %541 = vmatprep.subr.bf16.mxu0 0
    %542 = vmatpush1.bf16.msra.mxu0 %v520
    %543 = vmatprep.subr.bf16.mxu0 0
    %544 = vmatpush1.bf16.msra.mxu0 %v519
    %545 = vmatprep.subr.bf16.mxu0 0
    %546 = vmatpush1.bf16.msra.mxu0 %v518
    %547 = vmatprep.subr.bf16.mxu0 0
    %548 = vmatpush1.bf16.msra.mxu0 %v517
    %549 = vmatprep.subr.bf16.mxu0 0
    %550 = vmatpush2.bf16.msra.mxu0 0
    %551 = vmatprep.subr.bf16.mxu0 0
    %552 = vmatpush2.bf16.msra.mxu0 0
    %553 = vmatprep.subr.bf16.mxu0 0
    %554 = vmatpush2.bf16.msra.mxu0 0
    %555 = vmatprep.subr.bf16.mxu0 0
    %556 = vmatpush2.bf16.msra.mxu0 0
    %557 = vmatprep.subr.bf16.mxu0 0
    %558 = vmatpush2.bf16.msra.mxu0 0
    %559 = vmatprep.subr.bf16.mxu0 0
    %560 = vmatpush2.bf16.msra.mxu0 0
    %561 = vmatprep.subr.bf16.mxu0 0
    %562 = vmatpush2.bf16.msra.mxu0 0
    %563 = vmatprep.subr.bf16.mxu0 0
    %564 = vmatpush2.bf16.msra.mxu0 0
    %565 = vmatprep.mubr.bf16.mxu0 0
    %566 = vmatmul.mubr.bf16.gmra.mxu0 %v484
    %v567 = vpop.f32.mrf.mxu0
    %v568 = vadd.f32 0.0, %v567
    %v569 = vpop.f32.mrf.mxu0
    %v570 = vpop.f32.mrf.mxu0
    %v571 = vadd.f32 0.0, %v570
    %v572 = vpop.f32.mrf.mxu0
    %573 = vdwg.mxu0
    %v574 = vlaneseq
    %v575 = vshrl.u32 %v574, 7
    %v576 = vsub.s32 0, %v575
    %v577 = vrot.slane %v201, %v576
    %v594 = vunpack.c.l.b16 %v115
    %v595 = vunpack.c.l.b16 %v116
    %v596 = vunpack.c.l.b16 %v117
    %v597 = vunpack.c.l.b16 %v118
    %v598 = vunpack.c.l.b16 %v119
    %v599 = vunpack.c.l.b16 %v120
    %v600 = vunpack.c.l.b16 %v121
    %v601 = vunpack.c.l.b16 %v122
    %v602 = vunpack.c.l.b16 %v123
    %v603 = vunpack.c.l.b16 %v124
    %v604 = vunpack.c.l.b16 %v125
    %v605 = vunpack.c.l.b16 %v126
    %v606 = vunpack.c.l.b16 %v127
    %v607 = vunpack.c.l.b16 %v128
    %v608 = vunpack.c.l.b16 %v129
    %v609 = vunpack.c.l.b16 %v130
    %v610 = vpack.c.b16 %v595, %v594
    %v611 = vpack.c.b16 %v597, %v596
    %v612 = vpack.c.b16 %v599, %v598
    %v613 = vpack.c.b16 %v601, %v600
    %v614 = vpack.c.b16 %v603, %v602
    %v615 = vpack.c.b16 %v605, %v604
    %v616 = vpack.c.b16 %v607, %v606
    %v617 = vpack.c.b16 %v609, %v608
    %626 = vmatprep.subr.bf16.mxu0 0
    %627 = vmatpush1.bf16.msra.mxu0 %v617
    %628 = vmatprep.subr.bf16.mxu0 0
    %629 = vmatpush1.bf16.msra.mxu0 %v616
    %630 = vmatprep.subr.bf16.mxu0 0
    %631 = vmatpush1.bf16.msra.mxu0 %v615
    %632 = vmatprep.subr.bf16.mxu0 0
    %633 = vmatpush1.bf16.msra.mxu0 %v614
    %634 = vmatprep.subr.bf16.mxu0 0
    %635 = vmatpush1.bf16.msra.mxu0 %v613
    %636 = vmatprep.subr.bf16.mxu0 0
    %637 = vmatpush1.bf16.msra.mxu0 %v612
    %638 = vmatprep.subr.bf16.mxu0 0
    %639 = vmatpush1.bf16.msra.mxu0 %v611
    %640 = vmatprep.subr.bf16.mxu0 0
    %641 = vmatpush1.bf16.msra.mxu0 %v610
    %642 = vmatprep.subr.bf16.mxu0 0
    %643 = vmatpush2.bf16.msra.mxu0 0
    %644 = vmatprep.subr.bf16.mxu0 0
    %645 = vmatpush2.bf16.msra.mxu0 0
    %646 = vmatprep.subr.bf16.mxu0 0
    %647 = vmatpush2.bf16.msra.mxu0 0
    %648 = vmatprep.subr.bf16.mxu0 0
    %649 = vmatpush2.bf16.msra.mxu0 0
    %650 = vmatprep.subr.bf16.mxu0 0
    %651 = vmatpush2.bf16.msra.mxu0 0
    %652 = vmatprep.subr.bf16.mxu0 0
    %653 = vmatpush2.bf16.msra.mxu0 0
    %654 = vmatprep.subr.bf16.mxu0 0
    %655 = vmatpush2.bf16.msra.mxu0 0
    %656 = vmatprep.subr.bf16.mxu0 0
    %657 = vmatpush2.bf16.msra.mxu0 0
    %658 = vmatprep.mubr.bf16.mxu0 0
    %659 = vmatmul.mubr.bf16.gmra.mxu0 %v287
    %v660 = vpop.f32.mrf.mxu0
    %v661 = vadd.f32 %v577, %v660
    %v662 = vpop.f32.mrf.mxu0
    %v663 = vpop.f32.mrf.mxu0
    %v664 = vadd.f32 %v577, %v663
    %v665 = vpop.f32.mrf.mxu0
    %666 = vdwg.mxu0
    %v667 = vlaneseq
    %v668 = vshrl.u32 %v667, 7
    %v669 = vsub.s32 0, %v668
    %v670 = vrot.slane %v202, %v669
    %v687 = vunpack.c.l.b16 %v132
    %v688 = vunpack.c.l.b16 %v133
    %v689 = vunpack.c.l.b16 %v134
    %v690 = vunpack.c.l.b16 %v135
    %v691 = vunpack.c.l.b16 %v136
    %v692 = vunpack.c.l.b16 %v137
    %v693 = vunpack.c.l.b16 %v138
    %v694 = vunpack.c.l.b16 %v139
    %v695 = vunpack.c.l.b16 %v140
    %v696 = vunpack.c.l.b16 %v141
    %v697 = vunpack.c.l.b16 %v142
    %v698 = vunpack.c.l.b16 %v143
    %v699 = vunpack.c.l.b16 %v144
    %v700 = vunpack.c.l.b16 %v145
    %v701 = vunpack.c.l.b16 %v146
    %v702 = vunpack.c.l.b16 %v147
    %v703 = vpack.c.b16 %v688, %v687
    %v704 = vpack.c.b16 %v690, %v689
    %v705 = vpack.c.b16 %v692, %v691
    %v706 = vpack.c.b16 %v694, %v693
    %v707 = vpack.c.b16 %v696, %v695
    %v708 = vpack.c.b16 %v698, %v697
    %v709 = vpack.c.b16 %v700, %v699
    %v710 = vpack.c.b16 %v702, %v701
    %719 = vmatprep.subr.bf16.mxu0 0
    %720 = vmatpush1.bf16.msra.mxu0 %v710
    %721 = vmatprep.subr.bf16.mxu0 0
    %722 = vmatpush1.bf16.msra.mxu0 %v709
    %723 = vmatprep.subr.bf16.mxu0 0
    %724 = vmatpush1.bf16.msra.mxu0 %v708
    %725 = vmatprep.subr.bf16.mxu0 0
    %726 = vmatpush1.bf16.msra.mxu0 %v707
    %727 = vmatprep.subr.bf16.mxu0 0
    %728 = vmatpush1.bf16.msra.mxu0 %v706
    %729 = vmatprep.subr.bf16.mxu0 0
    %730 = vmatpush1.bf16.msra.mxu0 %v705
    %731 = vmatprep.subr.bf16.mxu0 0
    %732 = vmatpush1.bf16.msra.mxu0 %v704
    %733 = vmatprep.subr.bf16.mxu0 0
    %734 = vmatpush1.bf16.msra.mxu0 %v703
    %735 = vmatprep.subr.bf16.mxu0 0
    %736 = vmatpush2.bf16.msra.mxu0 0
    %737 = vmatprep.subr.bf16.mxu0 0
    %738 = vmatpush2.bf16.msra.mxu0 0
    %739 = vmatprep.subr.bf16.mxu0 0
    %740 = vmatpush2.bf16.msra.mxu0 0
    %741 = vmatprep.subr.bf16.mxu0 0
    %742 = vmatpush2.bf16.msra.mxu0 0
    %743 = vmatprep.subr.bf16.mxu0 0
    %744 = vmatpush2.bf16.msra.mxu0 0
    %745 = vmatprep.subr.bf16.mxu0 0
    %746 = vmatpush2.bf16.msra.mxu0 0
    %747 = vmatprep.subr.bf16.mxu0 0
    %748 = vmatpush2.bf16.msra.mxu0 0
    %749 = vmatprep.subr.bf16.mxu0 0
    %750 = vmatpush2.bf16.msra.mxu0 0
    %751 = vmatprep.mubr.bf16.mxu0 0
    %752 = vmatmul.mubr.bf16.gmra.mxu0 %v358
    %v753 = vpop.f32.mrf.mxu0
    %v754 = vadd.f32 %v670, %v753
    %v755 = vpop.f32.mrf.mxu0
    %v756 = vpop.f32.mrf.mxu0
    %v757 = vadd.f32 %v670, %v756
    %v758 = vpop.f32.mrf.mxu0
    %759 = vdwg.mxu0
    %v760 = vmax.f32 %v568, 0.0
    %v761 = vmax.f32 %v571, 0.0
    %v762 = vmax.f32 %v661, 0.0
    %v763 = vmax.f32 %v664, 0.0
    %v764 = vmax.f32 %v754, 0.0
    %v765 = vmax.f32 %v757, 0.0
    %v766 = vpack.c.bf16 %v761, %v760
    %v767 = vpack.c.bf16 %v763, %v762
    %v768 = vpack.c.bf16 %v765, %v764
    %v769 = vlaneseq
    %v770 = vshrl.u32 %v769, 7
    %v771 = vsub.s32 0, %v770
    %v772 = vrot.slane %v199, %v771
    %v789 = vunpack.c.l.b16 %v149
    %v790 = vunpack.c.l.b16 %v150
    %v791 = vunpack.c.l.b16 %v151
    %v792 = vunpack.c.l.b16 %v152
    %v793 = vunpack.c.l.b16 %v153
    %v794 = vunpack.c.l.b16 %v154
    %v795 = vunpack.c.l.b16 %v155
    %v796 = vunpack.c.l.b16 %v156
    %v797 = vunpack.c.l.b16 %v157
    %v798 = vunpack.c.l.b16 %v158
    %v799 = vunpack.c.l.b16 %v159
    %v800 = vunpack.c.l.b16 %v160
    %v801 = vunpack.c.l.b16 %v161
    %v802 = vunpack.c.l.b16 %v162
    %v803 = vunpack.c.l.b16 %v163
    %v804 = vunpack.c.l.b16 %v164
    %v805 = vpack.c.b16 %v790, %v789
    %v806 = vpack.c.b16 %v792, %v791
    %v807 = vpack.c.b16 %v794, %v793
    %v808 = vpack.c.b16 %v796, %v795
    %v809 = vpack.c.b16 %v798, %v797
    %v810 = vpack.c.b16 %v800, %v799
    %v811 = vpack.c.b16 %v802, %v801
    %v812 = vpack.c.b16 %v804, %v803
    %821 = vmatprep.subr.bf16.mxu0 0
    %822 = vmatpush1.bf16.msra.mxu0 %v812
    %823 = vmatprep.subr.bf16.mxu0 0
    %824 = vmatpush1.bf16.msra.mxu0 %v811
    %825 = vmatprep.subr.bf16.mxu0 0
    %826 = vmatpush1.bf16.msra.mxu0 %v810
    %827 = vmatprep.subr.bf16.mxu0 0
    %828 = vmatpush1.bf16.msra.mxu0 %v809
    %829 = vmatprep.subr.bf16.mxu0 0
    %830 = vmatpush1.bf16.msra.mxu0 %v808
    %831 = vmatprep.subr.bf16.mxu0 0
    %832 = vmatpush1.bf16.msra.mxu0 %v807
    %833 = vmatprep.subr.bf16.mxu0 0
    %834 = vmatpush1.bf16.msra.mxu0 %v806
    %835 = vmatprep.subr.bf16.mxu0 0
    %836 = vmatpush1.bf16.msra.mxu0 %v805
    %837 = vmatprep.subr.bf16.mxu0 0
    %838 = vmatpush2.bf16.msra.mxu0 0
    %839 = vmatprep.subr.bf16.mxu0 0
    %840 = vmatpush2.bf16.msra.mxu0 0
    %841 = vmatprep.subr.bf16.mxu0 0
    %842 = vmatpush2.bf16.msra.mxu0 0
    %843 = vmatprep.subr.bf16.mxu0 0
    %844 = vmatpush2.bf16.msra.mxu0 0
    %845 = vmatprep.subr.bf16.mxu0 0
    %846 = vmatpush2.bf16.msra.mxu0 0
    %847 = vmatprep.subr.bf16.mxu0 0
    %848 = vmatpush2.bf16.msra.mxu0 0
    %849 = vmatprep.subr.bf16.mxu0 0
    %850 = vmatpush2.bf16.msra.mxu0 0
    %851 = vmatprep.subr.bf16.mxu0 0
    %852 = vmatpush2.bf16.msra.mxu0 0
    %853 = vmatprep.mubr.bf16.mxu0 0
    %854 = vmatmul.mubr.bf16.gmra.mxu0 %v766
    %v855 = vpop.f32.mrf.mxu0
    %v856 = vadd.f32 %v772, %v855
    %v857 = vpop.f32.mrf.mxu0
    %v858 = vpop.f32.mrf.mxu0
    %v859 = vadd.f32 %v772, %v858
    %v860 = vpop.f32.mrf.mxu0
    %861 = vmatprep.mubr.bf16.mxu0 0
    %862 = vmatmul.mubr.bf16.gmra.mxu0 %v767
    %v863 = vpop.f32.mrf.mxu0
    %v864 = vadd.f32 %v772, %v863
    %v865 = vpop.f32.mrf.mxu0
    %v866 = vpop.f32.mrf.mxu0
    %v867 = vadd.f32 %v772, %v866
    %v868 = vpop.f32.mrf.mxu0
    %869 = vmatprep.mubr.bf16.mxu0 0
    %870 = vmatmul.mubr.bf16.gmra.mxu0 %v768
    %v871 = vpop.f32.mrf.mxu0
    %v872 = vadd.f32 %v772, %v871
    %v873 = vpop.f32.mrf.mxu0
    %v874 = vpop.f32.mrf.mxu0
    %v875 = vadd.f32 %v772, %v874
    %v876 = vpop.f32.mrf.mxu0
    %877 = vdwg.mxu0
    %v878 = vpack.c.bf16 %v859, %v856
    %v879 = vpack.c.bf16 %v867, %v864
    %v880 = vpack.c.bf16 %v875, %v872
    %881 = vmatprep.subr.bf16.mxu0 0
    %882 = vmatpush1.bf16.msra.mxu0 0
    %883 = vmatprep.subr.bf16.mxu0 0
    %884 = vmatpush1.bf16.msra.mxu0 0
    %885 = vmatprep.subr.bf16.mxu0 0
    %886 = vmatpush1.bf16.msra.mxu0 0
    %887 = vmatprep.subr.bf16.mxu0 0
    %888 = vmatpush1.bf16.msra.mxu0 0
    %889 = vmatprep.subr.bf16.mxu0 0
    %890 = vmatpush1.bf16.msra.mxu0 0
    %891 = vmatprep.subr.bf16.mxu0 0
    %892 = vmatpush1.bf16.msra.mxu0 0
    %893 = vmatprep.subr.bf16.mxu0 0
    %894 = vmatpush1.bf16.msra.mxu0 0
    %895 = vmatprep.subr.bf16.mxu0 0
    %896 = vmatpush1.bf16.msra.mxu0 %v878
    %897 = vmatprep.subr.bf16.mxu0 0
    %898 = vmatpush2.bf16.msra.mxu0 0
    %899 = vmatprep.subr.bf16.mxu0 0
    %900 = vmatpush2.bf16.msra.mxu0 0
    %901 = vmatprep.subr.bf16.mxu0 0
    %902 = vmatpush2.bf16.msra.mxu0 0
    %903 = vmatprep.subr.bf16.mxu0 0
    %904 = vmatpush2.bf16.msra.mxu0 0
    %905 = vmatprep.subr.bf16.mxu0 0
    %906 = vmatpush2.bf16.msra.mxu0 0
    %907 = vmatprep.subr.bf16.mxu0 0
    %908 = vmatpush2.bf16.msra.mxu0 0
    %909 = vmatprep.subr.bf16.mxu0 0
    %910 = vmatpush2.bf16.msra.mxu0 0
    %911 = vmatprep.subr.bf16.mxu0 0
    %912 = vmatpush2.bf16.msra.mxu0 0
    %913 = vmatprep.mubr.bf16.mxu0 0
    %914 = vmatmul.mubr.bf16.gmra.mxu0 %v220
    %v915 = vpop.f32.mrf.mxu0
    %v916 = vadd.f32 0.0, %v915
    %v917 = vpop.f32.mrf.mxu0
    %v918 = vpop.f32.mrf.mxu0
    %v919 = vadd.f32 0.0, %v918
    %v920 = vpop.f32.mrf.mxu0
    %921 = vdwg.mxu0
    %924 = vrot.lane.b32.xlu0 %v916, 16
    %v925 = vpop.permute.xlu0 %924
    %926 = vrot.lane.b32.xlu0 %v919, 16
    %v927 = vpop.permute.xlu0 %926
    %v930 = vsel %vm218, 0.0, %v925
    %v931 = vsel %vm218, 0.0, %v927
    %v932 = vadd.f32 %v96, %v930
    %v933 = vadd.f32 %v97, %v931
    %934 = vmatprep.subr.bf16.mxu0 0
    %935 = vmatpush1.bf16.msra.mxu0 0
    %936 = vmatprep.subr.bf16.mxu0 0
    %937 = vmatpush1.bf16.msra.mxu0 0
    %938 = vmatprep.subr.bf16.mxu0 0
    %939 = vmatpush1.bf16.msra.mxu0 0
    %940 = vmatprep.subr.bf16.mxu0 0
    %941 = vmatpush1.bf16.msra.mxu0 0
    %942 = vmatprep.subr.bf16.mxu0 0
    %943 = vmatpush1.bf16.msra.mxu0 0
    %944 = vmatprep.subr.bf16.mxu0 0
    %945 = vmatpush1.bf16.msra.mxu0 0
    %946 = vmatprep.subr.bf16.mxu0 0
    %947 = vmatpush1.bf16.msra.mxu0 0
    %948 = vmatprep.subr.bf16.mxu0 0
    %949 = vmatpush1.bf16.msra.mxu0 %v879
    %950 = vmatprep.subr.bf16.mxu0 0
    %951 = vmatpush2.bf16.msra.mxu0 0
    %952 = vmatprep.subr.bf16.mxu0 0
    %953 = vmatpush2.bf16.msra.mxu0 0
    %954 = vmatprep.subr.bf16.mxu0 0
    %955 = vmatpush2.bf16.msra.mxu0 0
    %956 = vmatprep.subr.bf16.mxu0 0
    %957 = vmatpush2.bf16.msra.mxu0 0
    %958 = vmatprep.subr.bf16.mxu0 0
    %959 = vmatpush2.bf16.msra.mxu0 0
    %960 = vmatprep.subr.bf16.mxu0 0
    %961 = vmatpush2.bf16.msra.mxu0 0
    %962 = vmatprep.subr.bf16.mxu0 0
    %963 = vmatpush2.bf16.msra.mxu0 0
    %964 = vmatprep.subr.bf16.mxu0 0
    %965 = vmatpush2.bf16.msra.mxu0 0
    %966 = vmatprep.mubr.bf16.mxu0 0
    %967 = vmatmul.mubr.bf16.gmra.mxu0 %v290
    %v968 = vpop.f32.mrf.mxu0
    %v969 = vadd.f32 0.0, %v968
    %v970 = vpop.f32.mrf.mxu0
    %v971 = vpop.f32.mrf.mxu0
    %v972 = vadd.f32 0.0, %v971
    %v973 = vpop.f32.mrf.mxu0
    %974 = vdwg.mxu0
    %977 = vrot.lane.b32.xlu0 %v969, 32
    %v978 = vpop.permute.xlu0 %977
    %979 = vrot.lane.b32.xlu0 %v972, 32
    %v980 = vpop.permute.xlu0 %979
    %v983 = vsel %vm341, 0.0, %v978
    %v984 = vsel %vm341, 0.0, %v980
    %v985 = vadd.f32 %v932, %v983
    %v986 = vadd.f32 %v933, %v984
    %987 = vmatprep.subr.bf16.mxu0 0
    %988 = vmatpush1.bf16.msra.mxu0 0
    %989 = vmatprep.subr.bf16.mxu0 0
    %990 = vmatpush1.bf16.msra.mxu0 0
    %991 = vmatprep.subr.bf16.mxu0 0
    %992 = vmatpush1.bf16.msra.mxu0 0
    %993 = vmatprep.subr.bf16.mxu0 0
    %994 = vmatpush1.bf16.msra.mxu0 0
    %995 = vmatprep.subr.bf16.mxu0 0
    %996 = vmatpush1.bf16.msra.mxu0 0
    %997 = vmatprep.subr.bf16.mxu0 0
    %998 = vmatpush1.bf16.msra.mxu0 0
    %999 = vmatprep.subr.bf16.mxu0 0
    %1000 = vmatpush1.bf16.msra.mxu0 0
    %1001 = vmatprep.subr.bf16.mxu0 0
    %1002 = vmatpush1.bf16.msra.mxu0 %v880
    %1003 = vmatprep.subr.bf16.mxu0 0
    %1004 = vmatpush2.bf16.msra.mxu0 0
    %1005 = vmatprep.subr.bf16.mxu0 0
    %1006 = vmatpush2.bf16.msra.mxu0 0
    %1007 = vmatprep.subr.bf16.mxu0 0
    %1008 = vmatpush2.bf16.msra.mxu0 0
    %1009 = vmatprep.subr.bf16.mxu0 0
    %1010 = vmatpush2.bf16.msra.mxu0 0
    %1011 = vmatprep.subr.bf16.mxu0 0
    %1012 = vmatpush2.bf16.msra.mxu0 0
    %1013 = vmatprep.subr.bf16.mxu0 0
    %1014 = vmatpush2.bf16.msra.mxu0 0
    %1015 = vmatprep.subr.bf16.mxu0 0
    %1016 = vmatpush2.bf16.msra.mxu0 0
    %1017 = vmatprep.subr.bf16.mxu0 0
    %1018 = vmatpush2.bf16.msra.mxu0 0
    %1019 = vmatprep.mubr.bf16.mxu0 0
    %1020 = vmatmul.mubr.bf16.gmra.mxu0 %v361
    %v1021 = vpop.f32.mrf.mxu0
    %v1022 = vadd.f32 0.0, %v1021
    %v1023 = vpop.f32.mrf.mxu0
    %v1024 = vpop.f32.mrf.mxu0
    %v1025 = vadd.f32 0.0, %v1024
    %v1026 = vpop.f32.mrf.mxu0
    %1027 = vdwg.mxu0
    %1030 = vrot.lane.b32.xlu0 %v1022, 48
    %v1031 = vpop.permute.xlu0 %1030
    %1032 = vrot.lane.b32.xlu0 %v1025, 48
    %v1033 = vpop.permute.xlu0 %1032
    %v1036 = vsel %vm412, 0.0, %v1031
    %v1037 = vsel %vm412, 0.0, %v1033
    %v1038 = vadd.f32 %v985, %v1036
    %v1039 = vadd.f32 %v986, %v1037
    %1040 = vmatprep.subr.bf16.mxu0 0
    %1041 = vmatpush1.bf16.msra.mxu0 0
    %1042 = vmatprep.subr.bf16.mxu0 0
    %1043 = vmatpush1.bf16.msra.mxu0 0
    %1044 = vmatprep.subr.bf16.mxu0 0
    %1045 = vmatpush1.bf16.msra.mxu0 0
    %1046 = vmatprep.subr.bf16.mxu0 0
    %1047 = vmatpush1.bf16.msra.mxu0 0
    %1048 = vmatprep.subr.bf16.mxu0 0
    %1049 = vmatpush1.bf16.msra.mxu0 0
    %1050 = vmatprep.subr.bf16.mxu0 0
    %1051 = vmatpush1.bf16.msra.mxu0 0
    %1052 = vmatprep.subr.bf16.mxu0 0
    %1053 = vmatpush1.bf16.msra.mxu0 0
    %1054 = vmatprep.subr.bf16.mxu0 0
    %1055 = vmatpush1.bf16.msra.mxu0 %v878
    %1056 = vmatprep.subr.bf16.mxu0 0
    %1057 = vmatpush2.bf16.msra.mxu0 0
    %1058 = vmatprep.subr.bf16.mxu0 0
    %1059 = vmatpush2.bf16.msra.mxu0 0
    %1060 = vmatprep.subr.bf16.mxu0 0
    %1061 = vmatpush2.bf16.msra.mxu0 0
    %1062 = vmatprep.subr.bf16.mxu0 0
    %1063 = vmatpush2.bf16.msra.mxu0 0
    %1064 = vmatprep.subr.bf16.mxu0 0
    %1065 = vmatpush2.bf16.msra.mxu0 0
    %1066 = vmatprep.subr.bf16.mxu0 0
    %1067 = vmatpush2.bf16.msra.mxu0 0
    %1068 = vmatprep.subr.bf16.mxu0 0
    %1069 = vmatpush2.bf16.msra.mxu0 0
    %1070 = vmatprep.subr.bf16.mxu0 0
    %1071 = vmatpush2.bf16.msra.mxu0 0
    %1072 = vmatprep.mubr.bf16.mxu0 0
    %1073 = vmatmul.mubr.bf16.gmra.mxu0 %v426
    %v1074 = vpop.f32.mrf.mxu0
    %v1075 = vadd.f32 0.0, %v1074
    %v1076 = vpop.f32.mrf.mxu0
    %v1077 = vpop.f32.mrf.mxu0
    %v1078 = vadd.f32 0.0, %v1077
    %v1079 = vpop.f32.mrf.mxu0
    %1080 = vdwg.mxu0
    %1083 = vrot.lane.b32.xlu0 %v1075, 64
    %v1084 = vpop.permute.xlu0 %1083
    %1085 = vrot.lane.b32.xlu0 %v1078, 64
    %v1086 = vpop.permute.xlu0 %1085
    %v1089 = vsel %vm477, 0.0, %v1084
    %v1090 = vsel %vm477, 0.0, %v1086
    %v1091 = vadd.f32 %v1038, %v1089
    %v1092 = vadd.f32 %v1039, %v1090
    %v1093 = vadd.f32 %v856, %v1091
    %v1094 = vadd.f32 %v859, %v1092
    %v1095 = vpack.c.bf16 %v1094, %v1093
    %v1112 = vunpack.c.l.b16 %v166
    %v1113 = vunpack.c.l.b16 %v167
    %v1114 = vunpack.c.l.b16 %v168
    %v1115 = vunpack.c.l.b16 %v169
    %v1116 = vunpack.c.l.b16 %v170
    %v1117 = vunpack.c.l.b16 %v171
    %v1118 = vunpack.c.l.b16 %v172
    %v1119 = vunpack.c.l.b16 %v173
    %v1120 = vunpack.c.l.b16 %v174
    %v1121 = vunpack.c.l.b16 %v175
    %v1122 = vunpack.c.l.b16 %v176
    %v1123 = vunpack.c.l.b16 %v177
    %v1124 = vunpack.c.l.b16 %v178
    %v1125 = vunpack.c.l.b16 %v179
    %v1126 = vunpack.c.l.b16 %v180
    %v1127 = vunpack.c.l.b16 %v181
    %v1128 = vpack.c.b16 %v1113, %v1112
    %v1129 = vpack.c.b16 %v1115, %v1114
    %v1130 = vpack.c.b16 %v1117, %v1116
    %v1131 = vpack.c.b16 %v1119, %v1118
    %v1132 = vpack.c.b16 %v1121, %v1120
    %v1133 = vpack.c.b16 %v1123, %v1122
    %v1134 = vpack.c.b16 %v1125, %v1124
    %v1135 = vpack.c.b16 %v1127, %v1126
    %1144 = vmatprep.subr.bf16.mxu0 0
    %1145 = vmatpush1.bf16.msra.mxu0 %v1135
    %1146 = vmatprep.subr.bf16.mxu0 0
    %1147 = vmatpush1.bf16.msra.mxu0 %v1134
    %1148 = vmatprep.subr.bf16.mxu0 0
    %1149 = vmatpush1.bf16.msra.mxu0 %v1133
    %1150 = vmatprep.subr.bf16.mxu0 0
    %1151 = vmatpush1.bf16.msra.mxu0 %v1132
    %1152 = vmatprep.subr.bf16.mxu0 0
    %1153 = vmatpush1.bf16.msra.mxu0 %v1131
    %1154 = vmatprep.subr.bf16.mxu0 0
    %1155 = vmatpush1.bf16.msra.mxu0 %v1130
    %1156 = vmatprep.subr.bf16.mxu0 0
    %1157 = vmatpush1.bf16.msra.mxu0 %v1129
    %1158 = vmatprep.subr.bf16.mxu0 0
    %1159 = vmatpush1.bf16.msra.mxu0 %v1128
    %1160 = vmatprep.subr.bf16.mxu0 0
    %1161 = vmatpush2.bf16.msra.mxu0 0
    %1162 = vmatprep.subr.bf16.mxu0 0
    %1163 = vmatpush2.bf16.msra.mxu0 0
    %1164 = vmatprep.subr.bf16.mxu0 0
    %1165 = vmatpush2.bf16.msra.mxu0 0
    %1166 = vmatprep.subr.bf16.mxu0 0
    %1167 = vmatpush2.bf16.msra.mxu0 0
    %1168 = vmatprep.subr.bf16.mxu0 0
    %1169 = vmatpush2.bf16.msra.mxu0 0
    %1170 = vmatprep.subr.bf16.mxu0 0
    %1171 = vmatpush2.bf16.msra.mxu0 0
    %1172 = vmatprep.subr.bf16.mxu0 0
    %1173 = vmatpush2.bf16.msra.mxu0 0
    %1174 = vmatprep.subr.bf16.mxu0 0
    %1175 = vmatpush2.bf16.msra.mxu0 0
    %1176 = vmatprep.mubr.bf16.mxu0 0
    %1177 = vmatmul.mubr.bf16.gmra.mxu0 %v1095
    %v1178 = vpop.f32.mrf.mxu0
    %v1179 = vadd.f32 0.0, %v1178
    %v1180 = vpop.f32.mrf.mxu0
    %v1181 = vpop.f32.mrf.mxu0
    %v1182 = vadd.f32 0.0, %v1181
    %v1183 = vpop.f32.mrf.mxu0
    %1184 = vdwg.mxu0
    %v1185 = vmax.f32 %v1179, 0.0
    %v1186 = vmax.f32 %v1182, 0.0
    %v1187 = vpack.c.bf16 %v1186, %v1185
    %v1188 = vlaneseq
    %v1189 = vshrl.u32 %v1188, 7
    %v1190 = vsub.s32 0, %v1189
    %v1191 = vrot.slane %v200, %v1190
    %v1208 = vunpack.c.l.b16 %v183
    %v1209 = vunpack.c.l.b16 %v184
    %v1210 = vunpack.c.l.b16 %v185
    %v1211 = vunpack.c.l.b16 %v186
    %v1212 = vunpack.c.l.b16 %v187
    %v1213 = vunpack.c.l.b16 %v188
    %v1214 = vunpack.c.l.b16 %v189
    %v1215 = vunpack.c.l.b16 %v190
    %v1216 = vunpack.c.l.b16 %v191
    %v1217 = vunpack.c.l.b16 %v192
    %v1218 = vunpack.c.l.b16 %v193
    %v1219 = vunpack.c.l.b16 %v194
    %v1220 = vunpack.c.l.b16 %v195
    %v1221 = vunpack.c.l.b16 %v196
    %v1222 = vunpack.c.l.b16 %v197
    %v1223 = vunpack.c.l.b16 %v198
    %v1224 = vpack.c.b16 %v1209, %v1208
    %v1225 = vpack.c.b16 %v1211, %v1210
    %v1226 = vpack.c.b16 %v1213, %v1212
    %v1227 = vpack.c.b16 %v1215, %v1214
    %v1228 = vpack.c.b16 %v1217, %v1216
    %v1229 = vpack.c.b16 %v1219, %v1218
    %v1230 = vpack.c.b16 %v1221, %v1220
    %v1231 = vpack.c.b16 %v1223, %v1222
    %1240 = vmatprep.subr.bf16.mxu0 0
    %1241 = vmatpush1.bf16.msra.mxu0 %v1231
    %1242 = vmatprep.subr.bf16.mxu0 0
    %1243 = vmatpush1.bf16.msra.mxu0 %v1230
    %1244 = vmatprep.subr.bf16.mxu0 0
    %1245 = vmatpush1.bf16.msra.mxu0 %v1229
    %1246 = vmatprep.subr.bf16.mxu0 0
    %1247 = vmatpush1.bf16.msra.mxu0 %v1228
    %1248 = vmatprep.subr.bf16.mxu0 0
    %1249 = vmatpush1.bf16.msra.mxu0 %v1227
    %1250 = vmatprep.subr.bf16.mxu0 0
    %1251 = vmatpush1.bf16.msra.mxu0 %v1226
    %1252 = vmatprep.subr.bf16.mxu0 0
    %1253 = vmatpush1.bf16.msra.mxu0 %v1225
    %1254 = vmatprep.subr.bf16.mxu0 0
    %1255 = vmatpush1.bf16.msra.mxu0 %v1224
    %1256 = vmatprep.subr.bf16.mxu0 0
    %1257 = vmatpush2.bf16.msra.mxu0 0
    %1258 = vmatprep.subr.bf16.mxu0 0
    %1259 = vmatpush2.bf16.msra.mxu0 0
    %1260 = vmatprep.subr.bf16.mxu0 0
    %1261 = vmatpush2.bf16.msra.mxu0 0
    %1262 = vmatprep.subr.bf16.mxu0 0
    %1263 = vmatpush2.bf16.msra.mxu0 0
    %1264 = vmatprep.subr.bf16.mxu0 0
    %1265 = vmatpush2.bf16.msra.mxu0 0
    %1266 = vmatprep.subr.bf16.mxu0 0
    %1267 = vmatpush2.bf16.msra.mxu0 0
    %1268 = vmatprep.subr.bf16.mxu0 0
    %1269 = vmatpush2.bf16.msra.mxu0 0
    %1270 = vmatprep.subr.bf16.mxu0 0
    %1271 = vmatpush2.bf16.msra.mxu0 0
    %1272 = vmatprep.mubr.bf16.mxu0 0
    %1273 = vmatmul.mubr.bf16.gmra.mxu0 %v1187
    %v1274 = vpop.f32.mrf.mxu0
    %v1275 = vadd.f32 %v1191, %v1274
    %v1276 = vpop.f32.mrf.mxu0
    %v1277 = vpop.f32.mrf.mxu0
    %v1278 = vadd.f32 %v1191, %v1277
    %v1279 = vpop.f32.mrf.mxu0
    %1280 = vdwg.mxu0
    %1281 = vst [vmem:[#allocation11] sm:$0xff] %v1275
    %1282 = vst [vmem:[#allocation11 + $0x8] sm:$0xff] %v1278
    // Predicated region
    $region42: #{tpu_custom_call.1} parent=1 // pred_check
      _
    $region43: #{tpu_custom_call.1} parent=1 // pred_check_branch
      %1284 = sbr.rel (0) target = $region45
    $region44: #{tpu_custom_call.1} parent=1 // pred_region
      %s1286 = ssub.s32 256, 256
      %1287 = vsyncadd [#allocation4], %s1286
      %s1288 = sshll.u32 [#allocation11], 4
      %s1289 = int_to_ptr.vmem [resolvable:$true] %s1288
      %1294 = dma.vmem_to_hbm [thread:$0]  %s1289, 256, %s5, [#allocation4], 128, 128, 8
    $region45: #{tpu_custom_call.1} parent=1 // pred_fallthru
      _
    // Predicated region
    $region46: #{tpu_custom_call.1} parent=1 // pred_check
      _
    $region47: #{tpu_custom_call.1} parent=1 // pred_check_branch
      %1296 = sbr.rel (0) target = $region49
    $region48: #{tpu_custom_call.1} parent=1 // pred_region
      %1297 = dma.done [#allocation4], 256
    $region49: #{tpu_custom_call.1} parent=1 // pred_fallthru
      _
    %1298 = vsyncpa [#allocation3], 1
    %1299 = vsyncpa [#allocation6], 1
    %1300 = vsyncpa [#allocation9], 1
    %1301 = vsyncpa [#allocation4], 1

</llo_original>
